<compile_context>
chip_gen: v6e
topology: v6e:2x2x1
jax: 0.10.0
libtpu: 0.0.40
codegen_flags: <defaults>
</compile_context>

<pallas_src>
import numpy as np
import jax
import jax.numpy as jnp
from jax import lax
from jax.experimental import pallas as pl
from jax.experimental.pallas import tpu as pltpu


def _vmem_capacity_bytes():
    """Physical VMEM per core (generation-aware); conservative 64 MiB fallback."""
    try:
        info = pltpu.get_tpu_info()
        for attr in ("vmem_capacity_bytes", "vmem_size_bytes", "vmem_bytes"):
            v = getattr(info, attr, None)
            if v:
                return int(v)
    except Exception:
        pass
    return 64 * 2**20


def _pick_row_tile(N, H, Wp, Cin_p, Cpad, itemsize, vmem_cap):
    """Largest even row-tile TH dividing H that fits a generation-aware VMEM budget,
    preferring tiles that leave >= ~4 total grid steps (megacore / pipeline warmup)."""
    budget = (vmem_cap * 7) // 10          # ~45 MiB on v7x (64 MiB), ~90 MiB on v5e/v6e (128 MiB)
    wp2 = Wp + 2

    def est(th):
        body = th * wp2 * Cin_p * itemsize            # input body block
        halo = 2 * wp2 * Cin_p * itemsize             # 2-row halo block
        outb = th * Wp * Cpad * 4                     # f32 output block
        slab = (th + 2) * Wp * 3 * Cin_p * itemsize   # dx-shifted im2col slab (scratch)
        shifts = 3 * (th + 2) * Wp * Cin_p * itemsize  # dx-shift temporaries
        acc = 2 * th * Wp * Cpad * 4                  # matmul acc + relu/astype temp
        wgt = 2 * (9 * Cin_p * Cpad * itemsize + Cpad * 4)
        return 2 * (body + halo + outb) + slab + shifts + acc + wgt + (2 << 20)

    cands = sorted({d for d in range(2, H + 1)
                    if H % d == 0 and d % 2 == 0 and (d == H or d % 8 == 0)},
                   reverse=True)
    preferred = [d for d in cands if N * (H // d) >= 4] or cands
    for th in preferred:
        if est(th) <= budget:
            return th
    for th in cands:
        if est(th) <= budget:
            return th
    return cands[-1]


def _conv_bn_relu_kernel(xb_ref, xh_ref, w_ref, b_ref, o_ref, slab_ref):
    # xb_ref:   (1, TH, Wp+2, Cin_p)  body rows of the padded input tile
    # xh_ref:   (1, 2,  Wp+2, Cin_p)  the two halo rows directly below the body rows
    # w_ref:    (3, 3*Cin_p, Cpad)    per-dy weight slab; row index = dx*Cin_p + cin
    # b_ref:    (1, Cpad)             folded BN bias
    # o_ref:    (1, TH, Wp, Cpad)
    # slab_ref: (TH+2, Wp, 3*Cin_p)   VMEM scratch: dx-shifted im2col slab
    TH = xb_ref.shape[1]
    Wp2 = xb_ref.shape[2]
    Cin_p = xb_ref.shape[3]
    Wp = Wp2 - 2
    Cpad = o_ref.shape[3]

    # Build the dx-shifted slab once, directly from body + halo (no stitch copy).
    # Channel offsets dx*Cin_p are 128-aligned (Cin_p % 128 == 0) -> lane-dense stores.
    for dx in range(3):
        lo = dx * Cin_p
        slab_ref[0:TH, :, lo:lo + Cin_p] = xb_ref[0, :, dx:dx + Wp, :]
        slab_ref[TH:TH + 2, :, lo:lo + Cin_p] = xh_ref[0, :, dx:dx + Wp, :]

    # Three accumulating MXU matmuls (one per dy tap), K = 3*Cin_p, f32 accumulation.
    # The dy slices are outer-dim row ranges of the slab -> free (Wp % 8 == 0).
    k = 3 * Cin_p
    acc = jnp.dot(slab_ref[0:TH, :, :].reshape(TH * Wp, k), w_ref[0],
                  preferred_element_type=jnp.float32)
    acc = acc + jnp.dot(slab_ref[1:TH + 1, :, :].reshape(TH * Wp, k), w_ref[1],
                        preferred_element_type=jnp.float32)
    acc = acc + jnp.dot(slab_ref[2:TH + 2, :, :].reshape(TH * Wp, k), w_ref[2],
                        preferred_element_type=jnp.float32)

    # BN scale already folded into the weights: epilogue is just bias add + ReLU.
    y = jnp.maximum(acc + b_ref[...], 0.0)
    o_ref[0] = y.reshape(TH, Wp, Cpad).astype(o_ref.dtype)


def segnet_downsample_unit(x_nchw, w_oihw, gamma, beta, running_mean, running_var,
                           eps=1e-5, compute_dtype=jnp.float32):
    """Forward pass of SegnetDownsampleUnit (BatchNorm in inference mode).

    x_nchw: (N, Cin, H, W) float32 (NCHW, like the PyTorch module).
    compute_dtype: jnp.float32 (default; meets the 1e-4 check) or jnp.bfloat16
      (recommended on v6e/v7x: full-rate MXU, half the VMEM/HBM traffic; f32 accumulation).
    """
    N, Cin, H, W = x_nchw.shape
    Cout = w_oihw.shape[0]
    assert w_oihw.shape == (Cout, Cin, 3, 3)
    assert H % 2 == 0, "row-tile halo indexing assumes an even number of rows"

    # Lane / sublane friendly padded sizes.
    Cin_p = ((Cin + 127) // 128) * 128   # lane-aligned slab taps (offsets dx*Cin_p)
    Cpad = ((Cout + 127) // 128) * 128   # lane-dense output stores / full MXU N
    Wp = ((W + 7) // 8) * 8              # keep (TH, W, C) <-> (TH*W, C) reshapes no-ops

    # ---- parameter glue (tiny, plain JAX) ----
    # Binarize weights: sign() with 0 -> +1.
    w_bin = jnp.where(w_oihw >= 0.0, 1.0, -1.0).astype(jnp.float32)
    scale = gamma / jnp.sqrt(running_var + eps)                   # (Cout,)
    bias = beta - running_mean * scale                            # (Cout,)
    w_scaled = w_bin * scale[:, None, None, None]                 # fold BN scale into weights
    w_t = jnp.transpose(w_scaled, (2, 3, 1, 0))                   # (dy, dx, Cin, Cout)
    w_t = jnp.pad(w_t, ((0, 0), (0, 0), (0, Cin_p - Cin), (0, Cpad - Cout)))
    w_k = w_t.reshape(3, 3 * Cin_p, Cpad).astype(compute_dtype)   # [dy, dx*Cin_p + cin, cout]
    bias_row = jnp.pad(bias, (0, Cpad - Cout)).reshape(1, Cpad).astype(jnp.float32)

    # NCHW -> NHWC + halo/alignment padding (fuses into one HBM pass under jit).
    x_nhwc = jnp.transpose(x_nchw, (0, 2, 3, 1)).astype(compute_dtype)
    x_pad = jnp.pad(x_nhwc, ((0, 0), (1, 1), (1, 1 + (Wp - W)), (0, Cin_p - Cin)))

    # ---- generation-aware row tile ----
    itemsize = np.dtype(compute_dtype).itemsize
    vmem_cap = _vmem_capacity_bytes()
    TH = _pick_row_tile(N, H, Wp, Cin_p, Cpad, itemsize, vmem_cap)
    # TH must be even: the halo BlockSpec below uses block size 2 with block index
    # (h+1)*(TH//2) == ((h+1)*TH)/2, i.e. the two rows immediately below the body tile.
    assert H % TH == 0 and TH % 2 == 0
    grid = (N, H // TH)
    vmem_limit = int(min(max(32 * 2**20, (vmem_cap * 3) // 4), 112 * 2**20))

    out = pl.pallas_call(
        _conv_bn_relu_kernel,
        out_shape=jax.ShapeDtypeStruct((N, H, Wp, Cpad), jnp.float32),
        grid_spec=pltpu.PrefetchScalarGridSpec(
            num_scalar_prefetch=0,
            grid=grid,
            in_specs=[
                # Body rows [h*TH, h*TH + TH) of the padded input.
                pl.BlockSpec((1, TH, Wp + 2, Cin_p), lambda n, h: (n, h, 0, 0)),
                # 2-row halo just below the body: rows [(h+1)*TH, (h+1)*TH + 2).
                pl.BlockSpec((1, 2, Wp + 2, Cin_p),
                             lambda n, h: (n, (h + 1) * (TH // 2), 0, 0)),
                # Weights / bias stay VMEM-resident (constant index maps).
                pl.BlockSpec((3, 3 * Cin_p, Cpad), lambda n, h: (0, 0, 0)),
                pl.BlockSpec((1, Cpad), lambda n, h: (0, 0)),
            ],
            out_specs=pl.BlockSpec((1, TH, Wp, Cpad), lambda n, h: (n, h, 0, 0)),
            scratch_shapes=[
                pltpu.VMEM((TH + 2, Wp, 3 * Cin_p), compute_dtype),  # dx-shifted im2col slab
            ],
        ),
        compiler_params=pltpu.CompilerParams(
            dimension_semantics=("parallel", "parallel"),
            vmem_limit_bytes=vmem_limit),
    )(x_pad, x_pad, w_k, bias_row)

    # Drop alignment padding, NHWC -> NCHW to match the PyTorch convention.
    return jnp.transpose(out[:, :, :W, :Cout], (0, 3, 1, 2))


def _reference(x_nchw, w_oihw, gamma, beta, running_mean, running_var, eps=1e-5):
    """Pure-JAX reference of the same forward pass."""
    w_bin = jnp.where(w_oihw >= 0.0, 1.0, -1.0).astype(jnp.float32)
    x_nhwc = jnp.transpose(x_nchw, (0, 2, 3, 1))
    w_hwio = jnp.transpose(w_bin, (2, 3, 1, 0))  # HWIO
    y = lax.conv_general_dilated(
        x_nhwc, w_hwio, window_strides=(1, 1), padding="SAME",
        dimension_numbers=("NHWC", "HWIO", "NHWC"))
    scale = gamma / jnp.sqrt(running_var + eps)
    y = y * scale + (beta - running_mean * scale)
    y = jnp.maximum(y, 0.0)
    return jnp.transpose(y, (0, 3, 1, 2))


if __name__ == "__main__":
    key = jax.random.PRNGKey(0)
    k_x, k_w, k_g, k_b, k_m, k_v = jax.random.split(key, 6)

    N, Cin, Cout, H, W = 2, 4, 8, 16, 16

    x = jax.random.normal(k_x, (N, Cin, H, W), dtype=jnp.float32)
    w = 0.1 * jax.random.normal(k_w, (Cout, Cin, 3, 3), dtype=jnp.float32)
    gamma = 1.0 + 0.1 * jax.random.normal(k_g, (Cout,), dtype=jnp.float32)
    beta = 0.1 * jax.random.normal(k_b, (Cout,), dtype=jnp.float32)
    running_mean = 0.1 * jax.random.normal(k_m, (Cout,), dtype=jnp.float32)
    running_var = jnp.abs(1.0 + 0.1 * jax.random.normal(k_v, (Cout,), dtype=jnp.float32))

    out = segnet_downsample_unit(x, w, gamma, beta, running_mean, running_var)
    out = jax.block_until_ready(out)

    ref = _reference(x, w, gamma, beta, running_mean, running_var)
    assert out.shape == (N, Cout, H, W)
    assert jnp.allclose(out, ref, atol=1e-4, rtol=1e-4), "mismatch vs reference"

    print("KERNEL_OK")
</pallas_src>

<mosaic_0001>
module attributes {stable_mosaic.version = 11 : i64} {
  func.func @_conv_bn_relu_kernel(%arg0: i32, %arg1: i32, %arg2: memref<1x8x18x128xf32, #tpu.memory_space<vmem>>, %arg3: memref<1x2x18x128xf32, #tpu.memory_space<vmem>>, %arg4: memref<3x384x128xf32, #tpu.memory_space<vmem>>, %arg5: memref<1x128xf32, #tpu.memory_space<vmem>>, %arg6: memref<1x8x16x128xf32, #tpu.memory_space<vmem>>, %arg7: memref<10x16x384xf32, #tpu.memory_space<vmem>>) attributes {dimension_semantics = [#tpu.dimension_semantics<parallel>, #tpu.dimension_semantics<parallel>], iteration_bounds = array<i64: 2, 2>, scalar_prefetch = 0 : i64, scratch_operands = 1 : i64, tpu.core_type = #tpu.core_type<tc>, window_params = [{transform_indices = @transform_0, window_bounds = array<i64: 1, 8, 18, 128>}, {transform_indices = @transform_1, window_bounds = array<i64: 1, 2, 18, 128>}, {pipeline_mode = #tpu.pipeline_mode<synchronous>, transform_indices = @transform_2, window_bounds = array<i64: 3, 384, 128>}, {pipeline_mode = #tpu.pipeline_mode<synchronous>, transform_indices = @transform_3, window_bounds = array<i64: 1, 128>}, {transform_indices = @transform_4, window_bounds = array<i64: 1, 8, 16, 128>}]} {
    %c0 = arith.constant 0 : index
    %c0_0 = arith.constant 0 : index
    %c0_1 = arith.constant 0 : index
    %c0_2 = arith.constant 0 : index
    %0 = vector.load %arg2[%c0, %c0_0, %c0_1, %c0_2] : memref<1x8x18x128xf32, #tpu.memory_space<vmem>>, vector<1x8x16x128xf32>
    %1 = vector.shape_cast %0 : vector<1x8x16x128xf32> to vector<8x16x128xf32>
    %c0_3 = arith.constant 0 : index
    %c0_4 = arith.constant 0 : index
    %c0_5 = arith.constant 0 : index
    %2 = vector.load %arg7[%c0_3, %c0_4, %c0_5] : memref<10x16x384xf32, #tpu.memory_space<vmem>>, vector<8x16x128xf32>
    tpu.vector_store %arg7[%c0_3, %c0_4, %c0_5], %1 {strides = array<i32>} : memref<10x16x384xf32, #tpu.memory_space<vmem>>, vector<8x16x128xf32>,
    %c0_6 = arith.constant 0 : index
    %c0_7 = arith.constant 0 : index
    %c0_8 = arith.constant 0 : index
    %c0_9 = arith.constant 0 : index
    %3 = vector.load %arg3[%c0_6, %c0_7, %c0_8, %c0_9] : memref<1x2x18x128xf32, #tpu.memory_space<vmem>>, vector<1x2x16x128xf32>
    %4 = vector.shape_cast %3 : vector<1x2x16x128xf32> to vector<2x16x128xf32>
    %c8 = arith.constant 8 : index
    %c0_10 = arith.constant 0 : index
    %c0_11 = arith.constant 0 : index
    %5 = vector.load %arg7[%c8, %c0_10, %c0_11] : memref<10x16x384xf32, #tpu.memory_space<vmem>>, vector<2x16x128xf32>
    tpu.vector_store %arg7[%c8, %c0_10, %c0_11], %4 {strides = array<i32>} : memref<10x16x384xf32, #tpu.memory_space<vmem>>, vector<2x16x128xf32>,
    %c0_12 = arith.constant 0 : index
    %c0_13 = arith.constant 0 : index
    %c1 = arith.constant 1 : index
    %c0_14 = arith.constant 0 : index
    %6 = vector.load %arg2[%c0_12, %c0_13, %c1, %c0_14] : memref<1x8x18x128xf32, #tpu.memory_space<vmem>>, vector<1x8x16x128xf32>
    %7 = vector.shape_cast %6 : vector<1x8x16x128xf32> to vector<8x16x128xf32>
    %c0_15 = arith.constant 0 : index
    %c0_16 = arith.constant 0 : index
    %c128 = arith.constant 128 : index
    %8 = vector.load %arg7[%c0_15, %c0_16, %c128] : memref<10x16x384xf32, #tpu.memory_space<vmem>>, vector<8x16x128xf32>
    tpu.vector_store %arg7[%c0_15, %c0_16, %c128], %7 {strides = array<i32>} : memref<10x16x384xf32, #tpu.memory_space<vmem>>, vector<8x16x128xf32>,
    %c0_17 = arith.constant 0 : index
    %c0_18 = arith.constant 0 : index
    %c1_19 = arith.constant 1 : index
    %c0_20 = arith.constant 0 : index
    %9 = vector.load %arg3[%c0_17, %c0_18, %c1_19, %c0_20] : memref<1x2x18x128xf32, #tpu.memory_space<vmem>>, vector<1x2x16x128xf32>
    %10 = vector.shape_cast %9 : vector<1x2x16x128xf32> to vector<2x16x128xf32>
    %c8_21 = arith.constant 8 : index
    %c0_22 = arith.constant 0 : index
    %c128_23 = arith.constant 128 : index
    %11 = vector.load %arg7[%c8_21, %c0_22, %c128_23] : memref<10x16x384xf32, #tpu.memory_space<vmem>>, vector<2x16x128xf32>
    tpu.vector_store %arg7[%c8_21, %c0_22, %c128_23], %10 {strides = array<i32>} : memref<10x16x384xf32, #tpu.memory_space<vmem>>, vector<2x16x128xf32>,
    %c0_24 = arith.constant 0 : index
    %c0_25 = arith.constant 0 : index
    %c2 = arith.constant 2 : index
    %c0_26 = arith.constant 0 : index
    %12 = vector.load %arg2[%c0_24, %c0_25, %c2, %c0_26] : memref<1x8x18x128xf32, #tpu.memory_space<vmem>>, vector<1x8x16x128xf32>
    %13 = vector.shape_cast %12 : vector<1x8x16x128xf32> to vector<8x16x128xf32>
    %c0_27 = arith.constant 0 : index
    %c0_28 = arith.constant 0 : index
    %c256 = arith.constant 256 : index
    %14 = vector.load %arg7[%c0_27, %c0_28, %c256] : memref<10x16x384xf32, #tpu.memory_space<vmem>>, vector<8x16x128xf32>
    tpu.vector_store %arg7[%c0_27, %c0_28, %c256], %13 {strides = array<i32>} : memref<10x16x384xf32, #tpu.memory_space<vmem>>, vector<8x16x128xf32>,
    %c0_29 = arith.constant 0 : index
    %c0_30 = arith.constant 0 : index
    %c2_31 = arith.constant 2 : index
    %c0_32 = arith.constant 0 : index
    %15 = vector.load %arg3[%c0_29, %c0_30, %c2_31, %c0_32] : memref<1x2x18x128xf32, #tpu.memory_space<vmem>>, vector<1x2x16x128xf32>
    %16 = vector.shape_cast %15 : vector<1x2x16x128xf32> to vector<2x16x128xf32>
    %c8_33 = arith.constant 8 : index
    %c0_34 = arith.constant 0 : index
    %c256_35 = arith.constant 256 : index
    %17 = vector.load %arg7[%c8_33, %c0_34, %c256_35] : memref<10x16x384xf32, #tpu.memory_space<vmem>>, vector<2x16x128xf32>
    tpu.vector_store %arg7[%c8_33, %c0_34, %c256_35], %16 {strides = array<i32>} : memref<10x16x384xf32, #tpu.memory_space<vmem>>, vector<2x16x128xf32>,
    %c0_36 = arith.constant 0 : index
    %c0_37 = arith.constant 0 : index
    %c0_38 = arith.constant 0 : index
    %18 = vector.load %arg7[%c0_36, %c0_37, %c0_38] : memref<10x16x384xf32, #tpu.memory_space<vmem>>, vector<8x16x384xf32>
    %19 = vector.shape_cast %18 : vector<8x16x384xf32> to vector<128x384xf32>
    %c0_39 = arith.constant 0 : index
    %c0_40 = arith.constant 0 : index
    %c0_41 = arith.constant 0 : index
    %20 = vector.load %arg4[%c0_39, %c0_40, %c0_41] : memref<3x384x128xf32, #tpu.memory_space<vmem>>, vector<1x384x128xf32>
    %21 = vector.shape_cast %20 : vector<1x384x128xf32> to vector<384x128xf32>
    %cst = arith.constant dense<0.000000e+00> : vector<128x128xf32>
    %22 = tpu.matmul %19, %21, %cst {dimension_numbers = #tpu.dot_dimension_numbers<[1], [0], [0], [1], [0, 0, 1, 1], [], []>} : vector<128x384xf32>, vector<384x128xf32>, vector<128x128xf32> -> vector<128x128xf32>
    %c1_42 = arith.constant 1 : index
    %c0_43 = arith.constant 0 : index
    %c0_44 = arith.constant 0 : index
    %23 = vector.load %arg7[%c1_42, %c0_43, %c0_44] : memref<10x16x384xf32, #tpu.memory_space<vmem>>, vector<8x16x384xf32>
    %24 = vector.shape_cast %23 : vector<8x16x384xf32> to vector<128x384xf32>
    %c1_45 = arith.constant 1 : index
    %c0_46 = arith.constant 0 : index
    %c0_47 = arith.constant 0 : index
    %25 = vector.load %arg4[%c1_45, %c0_46, %c0_47] : memref<3x384x128xf32, #tpu.memory_space<vmem>>, vector<1x384x128xf32>
    %26 = vector.shape_cast %25 : vector<1x384x128xf32> to vector<384x128xf32>
    %cst_48 = arith.constant dense<0.000000e+00> : vector<128x128xf32>
    %27 = tpu.matmul %24, %26, %cst_48 {dimension_numbers = #tpu.dot_dimension_numbers<[1], [0], [0], [1], [0, 0, 1, 1], [], []>} : vector<128x384xf32>, vector<384x128xf32>, vector<128x128xf32> -> vector<128x128xf32>
    %28 = arith.addf %22, %27 : vector<128x128xf32>
    %c2_49 = arith.constant 2 : index
    %c0_50 = arith.constant 0 : index
    %c0_51 = arith.constant 0 : index
    %29 = vector.load %arg7[%c2_49, %c0_50, %c0_51] : memref<10x16x384xf32, #tpu.memory_space<vmem>>, vector<8x16x384xf32>
    %30 = vector.shape_cast %29 : vector<8x16x384xf32> to vector<128x384xf32>
    %c2_52 = arith.constant 2 : index
    %c0_53 = arith.constant 0 : index
    %c0_54 = arith.constant 0 : index
    %31 = vector.load %arg4[%c2_52, %c0_53, %c0_54] : memref<3x384x128xf32, #tpu.memory_space<vmem>>, vector<1x384x128xf32>
    %32 = vector.shape_cast %31 : vector<1x384x128xf32> to vector<384x128xf32>
    %cst_55 = arith.constant dense<0.000000e+00> : vector<128x128xf32>
    %33 = tpu.matmul %30, %32, %cst_55 {dimension_numbers = #tpu.dot_dimension_numbers<[1], [0], [0], [1], [0, 0, 1, 1], [], []>} : vector<128x384xf32>, vector<384x128xf32>, vector<128x128xf32> -> vector<128x128xf32>
    %34 = arith.addf %28, %33 : vector<128x128xf32>
    %c0_56 = arith.constant 0 : index
    %c0_57 = arith.constant 0 : index
    %35 = vector.load %arg5[%c0_56, %c0_57] : memref<1x128xf32, #tpu.memory_space<vmem>>, vector<1x128xf32>
    %36 = vector.broadcast %35 : vector<1x128xf32> to vector<128x128xf32>
    %37 = arith.addf %34, %36 : vector<128x128xf32>
    %cst_58 = arith.constant 0.000000e+00 : f32
    %38 = vector.broadcast %cst_58 : f32 to vector<128x128xf32>
    %39 = arith.maximumf %37, %38 : vector<128x128xf32>
    %40 = vector.shape_cast %39 : vector<128x128xf32> to vector<8x16x128xf32>
    %c0_59 = arith.constant 0 : index
    %c0_60 = arith.constant 0 : index
    %c0_61 = arith.constant 0 : index
    %c0_62 = arith.constant 0 : index
    %41 = vector.load %arg6[%c0_59, %c0_60, %c0_61, %c0_62] : memref<1x8x16x128xf32, #tpu.memory_space<vmem>>, vector<1x8x16x128xf32>
    %42 = vector.shape_cast %41 : vector<1x8x16x128xf32> to vector<8x16x128xf32>
    %43 = vector.shape_cast %40 : vector<8x16x128xf32> to vector<1x8x16x128xf32>
    tpu.vector_store %arg6[%c0_59, %c0_60, %c0_61, %c0_62], %43 {strides = array<i32>} : memref<1x8x16x128xf32, #tpu.memory_space<vmem>>, vector<1x8x16x128xf32>,
    return
  }
  func.func @transform_0(%arg0: i32, %arg1: i32) -> (i32, i32, i32, i32) {
    %c0_i32 = arith.constant 0 : i32
    %c0_i32_0 = arith.constant 0 : i32
    %c0_i32_1 = arith.constant 0 : i32
    return %arg0, %arg1, %c0_i32, %c0_i32_0 : i32, i32, i32, i32
  }
  func.func @transform_1(%arg0: i32, %arg1: i32) -> (i32, i32, i32, i32) {
    %c1_i32 = arith.constant 1 : i32
    %0 = arith.addi %arg1, %c1_i32 : i32
    %c4_i32 = arith.constant 4 : i32
    %1 = arith.muli %0, %c4_i32 : i32
    %c0_i32 = arith.constant 0 : i32
    %c0_i32_0 = arith.constant 0 : i32
    %c0_i32_1 = arith.constant 0 : i32
    return %arg0, %1, %c0_i32, %c0_i32_0 : i32, i32, i32, i32
  }
  func.func @transform_2(%arg0: i32, %arg1: i32) -> (i32, i32, i32) {
    %c0_i32 = arith.constant 0 : i32
    %c0_i32_0 = arith.constant 0 : i32
    %c0_i32_1 = arith.constant 0 : i32
    %c0_i32_2 = arith.constant 0 : i32
    return %c0_i32, %c0_i32_0, %c0_i32_1 : i32, i32, i32
  }
  func.func @transform_3(%arg0: i32, %arg1: i32) -> (i32, i32) {
    %c0_i32 = arith.constant 0 : i32
    %c0_i32_0 = arith.constant 0 : i32
    %c0_i32_1 = arith.constant 0 : i32
    return %c0_i32, %c0_i32_0 : i32, i32
  }
  func.func @transform_4(%arg0: i32, %arg1: i32) -> (i32, i32, i32, i32) {
    %c0_i32 = arith.constant 0 : i32
    %c0_i32_0 = arith.constant 0 : i32
    %c0_i32_1 = arith.constant 0 : i32
    return %arg0, %arg1, %c0_i32, %c0_i32_0 : i32, i32, i32, i32
  }
}

</mosaic_0001>

<llo_original>
// kernel: tpu_custom_call.1
$region0: #{tpu_custom_call.1}
  #allocation0 [shape = 'u32[]', space=smem, size = 0x4, offset = 0x4, fixed_abs, tag = 'smem constant byte address 0x4 - core index']
  #allocation1 [shape = 'u32[144,128]{1,0:T(1,128)}', space=vmem, size = 0x12000, scoped, tag = 'internal scratch']
  #allocation2 [shape = 'f32[10,16,384]{2,1,0:T(8,128)}', space=vmem, size = 0x3c000, scoped, tag = 'scratch operand']
  %s0 = inlined_call_operand.vmem [shape: f32[2,18,18,128], index: 0, kind: input, shape index: {}]
  %s1 = inlined_call_operand.vmem [shape: f32[2,18,18,128], index: 1, kind: input, shape index: {}]
  %s2 = inlined_call_operand.vmem [shape: f32[3,384,128], index: 2, kind: input, shape index: {}]
  %s3 = inlined_call_operand.vmem [shape: f32[1,128], index: 3, kind: input, shape index: {}]
  %s4 = inlined_call_operand.hbm [shape: f32[2,16,16,128], index: 4, kind: output, shape index: {}]
  %s5 = sld [smem:[#allocation0]]
  $region49: #{tpu_custom_call.1} parent=0
    _
  %s7 = ssub.s32 1, %s5
  %s8 = scalar_select 0, %s7, %s5
  $region1: #{tpu_custom_call.1} parent=0
    #allocation3 [shape = 'u8[131072]{0}', space=vmem, size = 0x20000, scoped, tag = 'output window, operand 0']
    #allocation4 [shape = 's32[2]{0}', space=sflag, size = 0x8, scoped, tag = 'scoped memory for tpu_custom_call.1']
    %9 = vsyncpa [#allocation4], 0
    %s10 = scalar_lea.sflag [#allocation4], 1
    %11 = vsyncpa %s10, 0
    loop: start=0, step=1, limit=6
    $region2: #{tpu_custom_call.1} parent=1 // loop_pre_header
      _
    $region3: #{tpu_custom_call.1} parent=1 // loop_header
      %s13 = sphi 0, %s17
      %p14 = scmp.ge.s32.totalorder %s13, 6
      %s20 = sphi 0, %s32
      %s21 = sphi 0, %s28
      %s22 = sphi 0, %s20
      %s23 = sphi 0, %s21
      %s24 = sphi 0, %s22
      %s25 = sphi 0, %s23
      %s37 = sphi 0, %s39
      %s40 = sphi 0, %s37
      %s41 = sphi 0, %s40
      %s57 = sphi 0, %s41
      %s69 = sphi 0, %s71
      %s72 = sphi 0, %s69
      %s73 = sphi 0, %s72
      %s89 = sphi 0, %s73
      %s93 = sphi 0, %s93
      %s95 = sphi 0, %s93
      %s96 = sphi 0, %s95
      %s110 = sphi 0, %s96
      %s114 = sphi 0, %s114
      %s116 = sphi 0, %s114
      %s117 = sphi 0, %s116
      %s131 = sphi 0, %s117
      %s139 = sphi 0, %s141
      %s142 = sphi 0, %s139
      %s143 = sphi 0, %s142
      %s159 = sphi 0, %s143
    $region4: #{tpu_custom_call.1} parent=1 // loop_header_branch
      %16 = sbr.rel (%p14) target = $region8
    $region5: #{tpu_custom_call.1} parent=1 // loop_body
      %s18 = ssub.s32 %s13, 1
      %s19 = ssub.s32 %s13, 2
      %s26 = sadd.s32 1, %s21
      %p27 = scmp.ge.s32.totalorder %s26, 2
      %s28 = scalar_select %p27, 0, %s26
      %s29 = sadd.s32 1, %s20
      %s30 = scalar_select %p27, %s29, %s20
      %p31 = scmp.ge.s32.totalorder %s30, 2
      %s32 = scalar_select %p31, 0, %s30
      %s33 = ssub.s32 %s20, %s32
      %s34 = ssub.s32 %s21, %s28
      %s35 = sor.u32 %s33, %s34
      %p36 = scmp.eq.s32.totalorder %s35, 0
      %s38 = sadd.s32 %s37, 1
      %s39 = scalar_select %p36, %s37, %s38
      %p42 = pneg %p36
      %p43 = scmp.eq.s32.totalorder %s13, 3
      %p44 = por %p42, %p43
      %p45 = scmp.ne.s32.totalorder %s37, %s40
      %p46 = scmp.eq.s32.totalorder %s13, 0
      %p47 = por %p45, %p46
      %p48 = scmp.ne.s32.totalorder %s37, %s40
      %p49 = scmp.eq.s32.totalorder %s18, 3
      %p50 = por %p48, %p49
      %p51 = scmp.ne.s32.totalorder %s40, %s41
      %p52 = scmp.eq.s32.totalorder %s18, 0
      %p53 = por %p51, %p52
      %p54 = scmp.ne.s32.totalorder %s40, %s41
      %p55 = scmp.eq.s32.totalorder %s19, 3
      %p56 = por %p54, %p55
      %p58 = scmp.ne.s32.totalorder %s41, %s57
      %p59 = scmp.eq.s32.totalorder %s19, 0
      %p60 = por %p58, %p59
      %s61 = sadd.s32 %s21, 1
      %s62 = smul.u32 %s61, 4
      %s63 = sadd.s32 %s28, 1
      %s64 = smul.u32 %s63, 4
      %s65 = ssub.s32 %s20, %s32
      %s66 = ssub.s32 %s62, %s64
      %s67 = sor.u32 %s65, %s66
      %p68 = scmp.eq.s32.totalorder %s67, 0
      %s70 = sadd.s32 %s69, 1
      %s71 = scalar_select %p68, %s69, %s70
      %p74 = pneg %p68
      %p75 = scmp.eq.s32.totalorder %s13, 3
      %p76 = por %p74, %p75
      %p77 = scmp.ne.s32.totalorder %s69, %s72
      %p78 = scmp.eq.s32.totalorder %s13, 0
      %p79 = por %p77, %p78
      %p80 = scmp.ne.s32.totalorder %s69, %s72
      %p81 = scmp.eq.s32.totalorder %s18, 3
      %p82 = por %p80, %p81
      %p83 = scmp.ne.s32.totalorder %s72, %s73
      %p84 = scmp.eq.s32.totalorder %s18, 0
      %p85 = por %p83, %p84
      %p86 = scmp.ne.s32.totalorder %s72, %s73
      %p87 = scmp.eq.s32.totalorder %s19, 3
      %p88 = por %p86, %p87
      %p90 = scmp.ne.s32.totalorder %s73, %s89
      %p91 = scmp.eq.s32.totalorder %s19, 0
      %p92 = por %p90, %p91
      %s94 = sadd.s32 %s93, 1
      %p97 = scmp.eq.s32.totalorder %s13, 3
      %p98 = scmp.ne.s32.totalorder %s93, %s95
      %p99 = scmp.eq.s32.totalorder %s13, 0
      %p100 = por %p98, %p99
      %p101 = scmp.ne.s32.totalorder %s93, %s95
      %p102 = scmp.eq.s32.totalorder %s18, 3
      %p103 = por %p101, %p102
      %p104 = scmp.ne.s32.totalorder %s95, %s96
      %p105 = scmp.eq.s32.totalorder %s18, 0
      %p106 = por %p104, %p105
      %p107 = scmp.ne.s32.totalorder %s95, %s96
      %p108 = scmp.eq.s32.totalorder %s19, 3
      %p109 = por %p107, %p108
      %p111 = scmp.ne.s32.totalorder %s96, %s110
      %p112 = scmp.eq.s32.totalorder %s19, 0
      %p113 = por %p111, %p112
      %s115 = sadd.s32 %s114, 1
      %p118 = scmp.eq.s32.totalorder %s13, 3
      %p119 = scmp.ne.s32.totalorder %s114, %s116
      %p120 = scmp.eq.s32.totalorder %s13, 0
      %p121 = por %p119, %p120
      %p122 = scmp.ne.s32.totalorder %s114, %s116
      %p123 = scmp.eq.s32.totalorder %s18, 3
      %p124 = por %p122, %p123
      %p125 = scmp.ne.s32.totalorder %s116, %s117
      %p126 = scmp.eq.s32.totalorder %s18, 0
      %p127 = por %p125, %p126
      %p128 = scmp.ne.s32.totalorder %s116, %s117
      %p129 = scmp.eq.s32.totalorder %s19, 3
      %p130 = por %p128, %p129
      %p132 = scmp.ne.s32.totalorder %s117, %s131
      %p133 = scmp.eq.s32.totalorder %s19, 0
      %p134 = por %p132, %p133
      %s135 = ssub.s32 %s20, %s32
      %s136 = ssub.s32 %s21, %s28
      %s137 = sor.u32 %s135, %s136
      %p138 = scmp.eq.s32.totalorder %s137, 0
      %s140 = sadd.s32 %s139, 1
      %s141 = scalar_select %p138, %s139, %s140
      %p144 = pneg %p138
      %p145 = scmp.eq.s32.totalorder %s13, 3
      %p146 = por %p144, %p145
      %p147 = scmp.ne.s32.totalorder %s139, %s142
      %p148 = scmp.eq.s32.totalorder %s13, 0
      %p149 = por %p147, %p148
      %p150 = scmp.ne.s32.totalorder %s139, %s142
      %p151 = scmp.eq.s32.totalorder %s18, 3
      %p152 = por %p150, %p151
      %p153 = scmp.ne.s32.totalorder %s142, %s143
      %p154 = scmp.eq.s32.totalorder %s18, 0
      %p155 = por %p153, %p154
      %p156 = scmp.ne.s32.totalorder %s142, %s143
      %p157 = scmp.eq.s32.totalorder %s19, 3
      %p158 = por %p156, %p157
      %p160 = scmp.ne.s32.totalorder %s143, %s159
      %p161 = scmp.eq.s32.totalorder %s19, 0
      %p162 = por %p160, %p161
      %p163 = scmp.le.s32.totalorder 1, %s13
      %p164 = scmp.lt.s32.totalorder %s13, 5
      %p165 = pnand %p163, %p164
      %p166 = pneg %p165
      // Predicated region
      $region9: #{tpu_custom_call.1} parent=5 // pred_check
        _
      $region10: #{tpu_custom_call.1} parent=5 // pred_check_branch
        %168 = sbr.rel (%p165) target = $region12
      $region11: #{tpu_custom_call.1} parent=5 // pred_region
        %s169 = ssub.s32 %s13, 1
        // Predicated region
        $region13: #{tpu_custom_call.1} parent=11 // pred_check
          %p170 = pneg %p106
        $region14: #{tpu_custom_call.1} parent=11 // pred_check_branch
          %172 = sbr.rel (%p170) target = $region16
        $region15: #{tpu_custom_call.1} parent=11 // pred_region
          _
        $region16: #{tpu_custom_call.1} parent=11 // pred_fallthru
          _
        // Predicated region
        $region17: #{tpu_custom_call.1} parent=11 // pred_check
          %p173 = pneg %p127
        $region18: #{tpu_custom_call.1} parent=11 // pred_check_branch
          %175 = sbr.rel (%p173) target = $region20
        $region19: #{tpu_custom_call.1} parent=11 // pred_region
          _
        $region20: #{tpu_custom_call.1} parent=11 // pred_fallthru
          _
      $region12: #{tpu_custom_call.1} parent=5 // pred_fallthru
        _
      %p176 = scmp.lt.s32.totalorder %s13, 4
      // Predicated region
      $region21: #{tpu_custom_call.1} parent=5 // pred_check
        %p177 = pneg %p176
      $region22: #{tpu_custom_call.1} parent=5 // pred_check_branch
        %179 = sbr.rel (%p177) target = $region24
      $region23: #{tpu_custom_call.1} parent=5 // pred_region
        // Predicated region
        $region25: #{tpu_custom_call.1} parent=23 // pred_check
          %p180 = pneg %p47
        $region26: #{tpu_custom_call.1} parent=23 // pred_check_branch
          %182 = sbr.rel (%p180) target = $region28
        $region27: #{tpu_custom_call.1} parent=23 // pred_region
          %s183 = smul.u32 8, %s21
          %s184 = ssub.s32 18, %s183
          %p185 = scmp.lt.s32.totalorder %s184, 8
          %s186 = scalar_select %p185, %s184, 8
          %s187 = smul.u32 128, %s186
          %s188 = smul.u32 %s187, 3
          %p189 = scmp.lt.s32.totalorder %s20, 1
          %s190 = scalar_select %p189, %s20, 1
          %p191 = scmp.lt.s32.totalorder %s183, 17
          %s192 = scalar_select %p191, %s183, 17
          %s193 = smul.addr %s192, 3
          %s194 = smul.addr %s190, 54
          %s195 = sadd.s32 %s193, %s194
          %s196 = smul.addr %s195, 8
          %s197 = scalar_lea.vmem %s0, %s196
          %s198 = smul.u32 8, %s21
          %s199 = ssub.s32 18, %s198
          %p200 = scmp.lt.s32.totalorder %s199, 8
          %s201 = scalar_select %p200, %s199, 8
          %s202 = smul.u32 128, %s201
          %s203 = smul.u32 %s202, 3
        $region28: #{tpu_custom_call.1} parent=23 // pred_fallthru
          _
        // Predicated region
        $region29: #{tpu_custom_call.1} parent=23 // pred_check
          %p204 = pneg %p79
        $region30: #{tpu_custom_call.1} parent=23 // pred_check_branch
          %206 = sbr.rel (%p204) target = $region32
        $region31: #{tpu_custom_call.1} parent=23 // pred_region
          %s207 = sadd.s32 %s21, 1
          %s208 = smul.u32 %s207, 4
          %s209 = smul.u32 2, %s208
          %p210 = scmp.lt.s32.totalorder %s20, 1
          %s211 = scalar_select %p210, %s20, 1
          %p212 = scmp.lt.s32.totalorder %s209, 17
          %s213 = scalar_select %p212, %s209, 17
          %s214 = smul.addr %s213, 3
          %s215 = smul.addr %s211, 54
          %s216 = sadd.s32 %s214, %s215
          %s217 = smul.addr %s216, 8
          %s218 = scalar_lea.vmem %s1, %s217
          %s219 = sadd.s32 %s21, 1
          %s220 = smul.u32 %s219, 4
          %s221 = smul.u32 2, %s220
        $region32: #{tpu_custom_call.1} parent=23 // pred_fallthru
          _
      $region24: #{tpu_custom_call.1} parent=5 // pred_fallthru
        _
      %p222 = scmp.le.s32.totalorder 1, %s13
      %p223 = scmp.lt.s32.totalorder %s13, 5
      %p224 = pnand %p222, %p223
      %p225 = pneg %p224
      // Predicated region
      $region33: #{tpu_custom_call.1} parent=5 // pred_check
        _
      $region34: #{tpu_custom_call.1} parent=5 // pred_check_branch
        %227 = sbr.rel (%p224) target = $region36
      $region35: #{tpu_custom_call.1} parent=5 // pred_region
        %s228 = ssub.s32 %s13, 1
        %s229 = smul.u32 8, %s23
        %s230 = ssub.s32 18, %s229
        %p231 = scmp.lt.s32.totalorder %s230, 8
        %s232 = scalar_select %p231, %s230, 8
        %s233 = smul.u32 128, %s232
        %s234 = smul.u32 %s233, 3
        %p235 = scmp.lt.s32.totalorder %s22, 1
        %s236 = scalar_select %p235, %s22, 1
        %p237 = scmp.lt.s32.totalorder %s229, 17
        %s238 = scalar_select %p237, %s229, 17
        %s239 = smul.addr %s238, 3
        %s240 = smul.addr %s236, 54
        %s241 = sadd.s32 %s239, %s240
        %s242 = smul.addr %s241, 8
        %s243 = scalar_lea.vmem %s0, %s242
        %p244 = pneg %p53
        %p245 = pneg %p50
        %s246 = sadd.s32 %s23, 1
        %s247 = smul.u32 %s246, 4
        %s248 = smul.u32 2, %s247
        %p249 = scmp.lt.s32.totalorder %s22, 1
        %s250 = scalar_select %p249, %s22, 1
        %p251 = scmp.lt.s32.totalorder %s248, 17
        %s252 = scalar_select %p251, %s248, 17
        %s253 = smul.addr %s252, 3
        %s254 = smul.addr %s250, 54
        %s255 = sadd.s32 %s253, %s254
        %s256 = smul.addr %s255, 8
        %s257 = scalar_lea.vmem %s1, %s256
        %p258 = pneg %p85
        %p259 = pneg %p82
        %p260 = pneg %p106
        %p261 = pneg %p103
        %p262 = pneg %p127
        %p263 = pneg %p124
        %p264 = pneg %p155
        %p265 = pneg %p152
        %s266 = sand.u32 %s142, 1
        %s267 = scalar_lea.sflag [#allocation4], %s266
        %s268 = sand.u32 %s142, 1
        %s269 = smul.addr %s268, 128
        %s270 = scalar_lea.vmem [#allocation3], %s269
        %s271 = smul.u32 8, %s23
        %s272 = ssub.s32 18, %s271
        %p273 = scmp.lt.s32.totalorder %s272, 8
        %s274 = scalar_select %p273, %s272, 8
        %s275 = smul.u32 128, %s274
        %s276 = smul.u32 %s275, 3
        %p277 = scmp.lt.s32.totalorder %s22, 1
        %s278 = scalar_select %p277, %s22, 1
        %p279 = scmp.lt.s32.totalorder %s271, 17
        %s280 = scalar_select %p279, %s271, 17
        %s281 = smul.addr %s280, 3
        %s282 = smul.addr %s278, 54
        %s283 = sadd.s32 %s281, %s282
        %s284 = smul.addr %s283, 8
        %s285 = scalar_lea.vmem %s0, %s284
        %s286 = smul.u32 8, %s23
        %s287 = ssub.s32 18, %s286
        %p288 = scmp.lt.s32.totalorder %s287, 8
        %s289 = scalar_select %p288, %s287, 8
        %s290 = smul.u32 128, %s289
        %s291 = smul.u32 %s290, 3
        %s292 = sadd.s32 %s23, 1
        %s293 = smul.u32 %s292, 4
        %s294 = smul.u32 2, %s293
        %p295 = scmp.lt.s32.totalorder %s22, 1
        %s296 = scalar_select %p295, %s22, 1
        %p297 = scmp.lt.s32.totalorder %s294, 17
        %s298 = scalar_select %p297, %s294, 17
        %s299 = smul.addr %s298, 3
        %s300 = smul.addr %s296, 54
        %s301 = sadd.s32 %s299, %s300
        %s302 = smul.addr %s301, 8
        %s303 = scalar_lea.vmem %s1, %s302
        %s304 = sadd.s32 %s23, 1
        %s305 = smul.u32 %s304, 4
        %s306 = smul.u32 2, %s305
        %s307 = smul.u32 8, %s23
        %v308 = vld [vmem:[%s285] sm:$0xff]
        %v309 = vld [vmem:[%s285 + $0x8] sm:$0xff]
        %v310 = vld [vmem:[%s285 + $0x18] sm:$0xff]
        %v311 = vld [vmem:[%s285 + $0x20] sm:$0xff]
        %v312 = vld [vmem:[%s285 + $0x30] sm:$0xff]
        %v313 = vld [vmem:[%s285 + $0x38] sm:$0xff]
        %v314 = vld [vmem:[%s285 + $0x48] sm:$0xff]
        %v315 = vld [vmem:[%s285 + $0x50] sm:$0xff]
        %v316 = vld [vmem:[%s285 + $0x60] sm:$0xff]
        %v317 = vld [vmem:[%s285 + $0x68] sm:$0xff]
        %v318 = vld [vmem:[%s285 + $0x78] sm:$0xff]
        %v319 = vld [vmem:[%s285 + $0x80] sm:$0xff]
        %v320 = vld [vmem:[%s285 + $0x90] sm:$0xff]
        %v321 = vld [vmem:[%s285 + $0x98] sm:$0xff]
        %v322 = vld [vmem:[%s285 + $0xa8] sm:$0xff]
        %v323 = vld [vmem:[%s285 + $0xb0] sm:$0xff]
        %324 = vst [vmem:[#allocation2] sm:$0xff] %v308
        %325 = vst [vmem:[#allocation2 + $0x18] sm:$0xff] %v309
        %326 = vst [vmem:[#allocation2 + $0x30] sm:$0xff] %v310
        %327 = vst [vmem:[#allocation2 + $0x48] sm:$0xff] %v311
        %328 = vst [vmem:[#allocation2 + $0x60] sm:$0xff] %v312
        %329 = vst [vmem:[#allocation2 + $0x78] sm:$0xff] %v313
        %330 = vst [vmem:[#allocation2 + $0x90] sm:$0xff] %v314
        %331 = vst [vmem:[#allocation2 + $0xa8] sm:$0xff] %v315
        %332 = vst [vmem:[#allocation2 + $0xc0] sm:$0xff] %v316
        %333 = vst [vmem:[#allocation2 + $0xd8] sm:$0xff] %v317
        %334 = vst [vmem:[#allocation2 + $0xf0] sm:$0xff] %v318
        %335 = vst [vmem:[#allocation2 + $0x108] sm:$0xff] %v319
        %336 = vst [vmem:[#allocation2 + $0x120] sm:$0xff] %v320
        %337 = vst [vmem:[#allocation2 + $0x138] sm:$0xff] %v321
        %338 = vst [vmem:[#allocation2 + $0x150] sm:$0xff] %v322
        %339 = vst [vmem:[#allocation2 + $0x168] sm:$0xff] %v323
        %v340 = vld [vmem:[%s303] sm:$0xff]
        %v341 = vld [vmem:[%s303 + $0x8] sm:$0xff]
        %v342 = vld [vmem:[%s303 + $0x18] sm:$0xff]
        %v343 = vld [vmem:[%s303 + $0x20] sm:$0xff]
        %s344 = scalar_lea.vmem [#allocation2], 384
        %345 = vst [vmem:[%s344] sm:$0xff] %v340
        %346 = vst [vmem:[%s344 + $0x18] sm:$0xff] %v341
        %347 = vst [vmem:[%s344 + $0x30] sm:$0xff] %v342
        %348 = vst [vmem:[%s344 + $0x48] sm:$0xff] %v343
        %v349 = vld [vmem:[%s285 + $0x1] sm:$0xff]
        %v350 = vld [vmem:[%s285 + $0x9] sm:$0xff]
        %v351 = vld [vmem:[%s285 + $0x19] sm:$0xff]
        %v352 = vld [vmem:[%s285 + $0x21] sm:$0xff]
        %v353 = vld [vmem:[%s285 + $0x31] sm:$0xff]
        %v354 = vld [vmem:[%s285 + $0x39] sm:$0xff]
        %v355 = vld [vmem:[%s285 + $0x49] sm:$0xff]
        %v356 = vld [vmem:[%s285 + $0x51] sm:$0xff]
        %v357 = vld [vmem:[%s285 + $0x61] sm:$0xff]
        %v358 = vld [vmem:[%s285 + $0x69] sm:$0xff]
        %v359 = vld [vmem:[%s285 + $0x79] sm:$0xff]
        %v360 = vld [vmem:[%s285 + $0x81] sm:$0xff]
        %v361 = vld [vmem:[%s285 + $0x91] sm:$0xff]
        %v362 = vld [vmem:[%s285 + $0x99] sm:$0xff]
        %v363 = vld [vmem:[%s285 + $0xa9] sm:$0xff]
        %v364 = vld [vmem:[%s285 + $0xb1] sm:$0xff]
        %365 = vst [vmem:[#allocation2 + $0x8] sm:$0xff] %v349
        %366 = vst [vmem:[#allocation2 + $0x20] sm:$0xff] %v350
        %367 = vst [vmem:[#allocation2 + $0x38] sm:$0xff] %v351
        %368 = vst [vmem:[#allocation2 + $0x50] sm:$0xff] %v352
        %369 = vst [vmem:[#allocation2 + $0x68] sm:$0xff] %v353
        %370 = vst [vmem:[#allocation2 + $0x80] sm:$0xff] %v354
        %371 = vst [vmem:[#allocation2 + $0x98] sm:$0xff] %v355
        %372 = vst [vmem:[#allocation2 + $0xb0] sm:$0xff] %v356
        %373 = vst [vmem:[#allocation2 + $0xc8] sm:$0xff] %v357
        %374 = vst [vmem:[#allocation2 + $0xe0] sm:$0xff] %v358
        %375 = vst [vmem:[#allocation2 + $0xf8] sm:$0xff] %v359
        %376 = vst [vmem:[#allocation2 + $0x110] sm:$0xff] %v360
        %377 = vst [vmem:[#allocation2 + $0x128] sm:$0xff] %v361
        %378 = vst [vmem:[#allocation2 + $0x140] sm:$0xff] %v362
        %379 = vst [vmem:[#allocation2 + $0x158] sm:$0xff] %v363
        %380 = vst [vmem:[#allocation2 + $0x170] sm:$0xff] %v364
        %v381 = vld [vmem:[%s303 + $0x1] sm:$0xff]
        %v382 = vld [vmem:[%s303 + $0x9] sm:$0xff]
        %v383 = vld [vmem:[%s303 + $0x19] sm:$0xff]
        %v384 = vld [vmem:[%s303 + $0x21] sm:$0xff]
        %385 = vst [vmem:[%s344 + $0x8] sm:$0xff] %v381
        %386 = vst [vmem:[%s344 + $0x20] sm:$0xff] %v382
        %387 = vst [vmem:[%s344 + $0x38] sm:$0xff] %v383
        %388 = vst [vmem:[%s344 + $0x50] sm:$0xff] %v384
        %v389 = vld [vmem:[%s285 + $0x2] sm:$0xff]
        %v390 = vld [vmem:[%s285 + $0xa] sm:$0xff]
        %v391 = vld [vmem:[%s285 + $0x1a] sm:$0xff]
        %v392 = vld [vmem:[%s285 + $0x22] sm:$0xff]
        %v393 = vld [vmem:[%s285 + $0x32] sm:$0xff]
        %v394 = vld [vmem:[%s285 + $0x3a] sm:$0xff]
        %v395 = vld [vmem:[%s285 + $0x4a] sm:$0xff]
        %v396 = vld [vmem:[%s285 + $0x52] sm:$0xff]
        %v397 = vld [vmem:[%s285 + $0x62] sm:$0xff]
        %v398 = vld [vmem:[%s285 + $0x6a] sm:$0xff]
        %v399 = vld [vmem:[%s285 + $0x7a] sm:$0xff]
        %v400 = vld [vmem:[%s285 + $0x82] sm:$0xff]
        %v401 = vld [vmem:[%s285 + $0x92] sm:$0xff]
        %v402 = vld [vmem:[%s285 + $0x9a] sm:$0xff]
        %v403 = vld [vmem:[%s285 + $0xaa] sm:$0xff]
        %v404 = vld [vmem:[%s285 + $0xb2] sm:$0xff]
        %405 = vst [vmem:[#allocation2 + $0x10] sm:$0xff] %v389
        %406 = vst [vmem:[#allocation2 + $0x28] sm:$0xff] %v390
        %407 = vst [vmem:[#allocation2 + $0x40] sm:$0xff] %v391
        %408 = vst [vmem:[#allocation2 + $0x58] sm:$0xff] %v392
        %409 = vst [vmem:[#allocation2 + $0x70] sm:$0xff] %v393
        %410 = vst [vmem:[#allocation2 + $0x88] sm:$0xff] %v394
        %411 = vst [vmem:[#allocation2 + $0xa0] sm:$0xff] %v395
        %412 = vst [vmem:[#allocation2 + $0xb8] sm:$0xff] %v396
        %413 = vst [vmem:[#allocation2 + $0xd0] sm:$0xff] %v397
        %414 = vst [vmem:[#allocation2 + $0xe8] sm:$0xff] %v398
        %415 = vst [vmem:[#allocation2 + $0x100] sm:$0xff] %v399
        %416 = vst [vmem:[#allocation2 + $0x118] sm:$0xff] %v400
        %417 = vst [vmem:[#allocation2 + $0x130] sm:$0xff] %v401
        %418 = vst [vmem:[#allocation2 + $0x148] sm:$0xff] %v402
        %419 = vst [vmem:[#allocation2 + $0x160] sm:$0xff] %v403
        %420 = vst [vmem:[#allocation2 + $0x178] sm:$0xff] %v404
        %v421 = vld [vmem:[%s303 + $0x2] sm:$0xff]
        %v422 = vld [vmem:[%s303 + $0xa] sm:$0xff]
        %v423 = vld [vmem:[%s303 + $0x1a] sm:$0xff]
        %v424 = vld [vmem:[%s303 + $0x22] sm:$0xff]
        %425 = vst [vmem:[%s344 + $0x10] sm:$0xff] %v421
        %426 = vst [vmem:[%s344 + $0x28] sm:$0xff] %v422
        %427 = vst [vmem:[%s344 + $0x40] sm:$0xff] %v423
        %428 = vst [vmem:[%s344 + $0x58] sm:$0xff] %v424
        %v429 = vld [vmem:[#allocation2] sm:$0xff]
        %v430 = vld [vmem:[#allocation2 + $0x8] sm:$0xff]
        %v431 = vld [vmem:[#allocation2 + $0x10] sm:$0xff]
        %v432 = vld [vmem:[#allocation2 + $0x18] sm:$0xff]
        %v433 = vld [vmem:[#allocation2 + $0x20] sm:$0xff]
        %v434 = vld [vmem:[#allocation2 + $0x28] sm:$0xff]
        %v435 = vld [vmem:[#allocation2 + $0x30] sm:$0xff]
        %v436 = vld [vmem:[#allocation2 + $0x38] sm:$0xff]
        %v437 = vld [vmem:[#allocation2 + $0x40] sm:$0xff]
        %v438 = vld [vmem:[#allocation2 + $0x48] sm:$0xff]
        %v439 = vld [vmem:[#allocation2 + $0x50] sm:$0xff]
        %v440 = vld [vmem:[#allocation2 + $0x58] sm:$0xff]
        %v441 = vld [vmem:[#allocation2 + $0x60] sm:$0xff]
        %v442 = vld [vmem:[#allocation2 + $0x68] sm:$0xff]
        %v443 = vld [vmem:[#allocation2 + $0x70] sm:$0xff]
        %v444 = vld [vmem:[#allocation2 + $0x78] sm:$0xff]
        %v445 = vld [vmem:[#allocation2 + $0x80] sm:$0xff]
        %v446 = vld [vmem:[#allocation2 + $0x88] sm:$0xff]
        %v447 = vld [vmem:[#allocation2 + $0x90] sm:$0xff]
        %v448 = vld [vmem:[#allocation2 + $0x98] sm:$0xff]
        %v449 = vld [vmem:[#allocation2 + $0xa0] sm:$0xff]
        %v450 = vld [vmem:[#allocation2 + $0xa8] sm:$0xff]
        %v451 = vld [vmem:[#allocation2 + $0xb0] sm:$0xff]
        %v452 = vld [vmem:[#allocation2 + $0xb8] sm:$0xff]
        %v453 = vld [vmem:[#allocation2 + $0xc0] sm:$0xff]
        %v454 = vld [vmem:[#allocation2 + $0xc8] sm:$0xff]
        %v455 = vld [vmem:[#allocation2 + $0xd0] sm:$0xff]
        %v456 = vld [vmem:[#allocation2 + $0xd8] sm:$0xff]
        %v457 = vld [vmem:[#allocation2 + $0xe0] sm:$0xff]
        %v458 = vld [vmem:[#allocation2 + $0xe8] sm:$0xff]
        %v459 = vld [vmem:[#allocation2 + $0xf0] sm:$0xff]
        %v460 = vld [vmem:[#allocation2 + $0xf8] sm:$0xff]
        %v461 = vld [vmem:[#allocation2 + $0x100] sm:$0xff]
        %v462 = vld [vmem:[#allocation2 + $0x108] sm:$0xff]
        %v463 = vld [vmem:[#allocation2 + $0x110] sm:$0xff]
        %v464 = vld [vmem:[#allocation2 + $0x118] sm:$0xff]
        %v465 = vld [vmem:[#allocation2 + $0x120] sm:$0xff]
        %v466 = vld [vmem:[#allocation2 + $0x128] sm:$0xff]
        %v467 = vld [vmem:[#allocation2 + $0x130] sm:$0xff]
        %v468 = vld [vmem:[#allocation2 + $0x138] sm:$0xff]
        %v469 = vld [vmem:[#allocation2 + $0x140] sm:$0xff]
        %v470 = vld [vmem:[#allocation2 + $0x148] sm:$0xff]
        %v471 = vld [vmem:[#allocation2 + $0x150] sm:$0xff]
        %v472 = vld [vmem:[#allocation2 + $0x158] sm:$0xff]
        %v473 = vld [vmem:[#allocation2 + $0x160] sm:$0xff]
        %v474 = vld [vmem:[#allocation2 + $0x168] sm:$0xff]
        %v475 = vld [vmem:[#allocation2 + $0x170] sm:$0xff]
        %v476 = vld [vmem:[#allocation2 + $0x178] sm:$0xff]
        %v477 = vld [vmem:[%s2] sm:$0xff]
        %v478 = vld [vmem:[%s2 + $0x8] sm:$0xff]
        %v479 = vld [vmem:[%s2 + $0x10] sm:$0xff]
        %v480 = vld [vmem:[%s2 + $0x18] sm:$0xff]
        %v481 = vld [vmem:[%s2 + $0x20] sm:$0xff]
        %v482 = vld [vmem:[%s2 + $0x28] sm:$0xff]
        %v483 = vld [vmem:[%s2 + $0x30] sm:$0xff]
        %v484 = vld [vmem:[%s2 + $0x38] sm:$0xff]
        %v485 = vld [vmem:[%s2 + $0x40] sm:$0xff]
        %v486 = vld [vmem:[%s2 + $0x48] sm:$0xff]
        %v487 = vld [vmem:[%s2 + $0x50] sm:$0xff]
        %v488 = vld [vmem:[%s2 + $0x58] sm:$0xff]
        %v489 = vld [vmem:[%s2 + $0x60] sm:$0xff]
        %v490 = vld [vmem:[%s2 + $0x68] sm:$0xff]
        %v491 = vld [vmem:[%s2 + $0x70] sm:$0xff]
        %v492 = vld [vmem:[%s2 + $0x78] sm:$0xff]
        %v493 = vld [vmem:[%s2 + $0x80] sm:$0xff]
        %v494 = vld [vmem:[%s2 + $0x88] sm:$0xff]
        %v495 = vld [vmem:[%s2 + $0x90] sm:$0xff]
        %v496 = vld [vmem:[%s2 + $0x98] sm:$0xff]
        %v497 = vld [vmem:[%s2 + $0xa0] sm:$0xff]
        %v498 = vld [vmem:[%s2 + $0xa8] sm:$0xff]
        %v499 = vld [vmem:[%s2 + $0xb0] sm:$0xff]
        %v500 = vld [vmem:[%s2 + $0xb8] sm:$0xff]
        %v501 = vld [vmem:[%s2 + $0xc0] sm:$0xff]
        %v502 = vld [vmem:[%s2 + $0xc8] sm:$0xff]
        %v503 = vld [vmem:[%s2 + $0xd0] sm:$0xff]
        %v504 = vld [vmem:[%s2 + $0xd8] sm:$0xff]
        %v505 = vld [vmem:[%s2 + $0xe0] sm:$0xff]
        %v506 = vld [vmem:[%s2 + $0xe8] sm:$0xff]
        %v507 = vld [vmem:[%s2 + $0xf0] sm:$0xff]
        %v508 = vld [vmem:[%s2 + $0xf8] sm:$0xff]
        %v509 = vld [vmem:[%s2 + $0x100] sm:$0xff]
        %v510 = vld [vmem:[%s2 + $0x108] sm:$0xff]
        %v511 = vld [vmem:[%s2 + $0x110] sm:$0xff]
        %v512 = vld [vmem:[%s2 + $0x118] sm:$0xff]
        %v513 = vld [vmem:[%s2 + $0x120] sm:$0xff]
        %v514 = vld [vmem:[%s2 + $0x128] sm:$0xff]
        %v515 = vld [vmem:[%s2 + $0x130] sm:$0xff]
        %v516 = vld [vmem:[%s2 + $0x138] sm:$0xff]
        %v517 = vld [vmem:[%s2 + $0x140] sm:$0xff]
        %v518 = vld [vmem:[%s2 + $0x148] sm:$0xff]
        %v519 = vld [vmem:[%s2 + $0x150] sm:$0xff]
        %v520 = vld [vmem:[%s2 + $0x158] sm:$0xff]
        %v521 = vld [vmem:[%s2 + $0x160] sm:$0xff]
        %v522 = vld [vmem:[%s2 + $0x168] sm:$0xff]
        %v523 = vld [vmem:[%s2 + $0x170] sm:$0xff]
        %v524 = vld [vmem:[%s2 + $0x178] sm:$0xff]
        %s525 = scalar_lea.vmem [#allocation2], 48
        %v526 = vld [vmem:[%s525] sm:$0xff]
        %v527 = vld [vmem:[%s525 + $0x8] sm:$0xff]
        %v528 = vld [vmem:[%s525 + $0x10] sm:$0xff]
        %v529 = vld [vmem:[%s525 + $0x18] sm:$0xff]
        %v530 = vld [vmem:[%s525 + $0x20] sm:$0xff]
        %v531 = vld [vmem:[%s525 + $0x28] sm:$0xff]
        %v532 = vld [vmem:[%s525 + $0x30] sm:$0xff]
        %v533 = vld [vmem:[%s525 + $0x38] sm:$0xff]
        %v534 = vld [vmem:[%s525 + $0x40] sm:$0xff]
        %v535 = vld [vmem:[%s525 + $0x48] sm:$0xff]
        %v536 = vld [vmem:[%s525 + $0x50] sm:$0xff]
        %v537 = vld [vmem:[%s525 + $0x58] sm:$0xff]
        %v538 = vld [vmem:[%s525 + $0x60] sm:$0xff]
        %v539 = vld [vmem:[%s525 + $0x68] sm:$0xff]
        %v540 = vld [vmem:[%s525 + $0x70] sm:$0xff]
        %v541 = vld [vmem:[%s525 + $0x78] sm:$0xff]
        %v542 = vld [vmem:[%s525 + $0x80] sm:$0xff]
        %v543 = vld [vmem:[%s525 + $0x88] sm:$0xff]
        %v544 = vld [vmem:[%s525 + $0x90] sm:$0xff]
        %v545 = vld [vmem:[%s525 + $0x98] sm:$0xff]
        %v546 = vld [vmem:[%s525 + $0xa0] sm:$0xff]
        %v547 = vld [vmem:[%s525 + $0xa8] sm:$0xff]
        %v548 = vld [vmem:[%s525 + $0xb0] sm:$0xff]
        %v549 = vld [vmem:[%s525 + $0xb8] sm:$0xff]
        %v550 = vld [vmem:[%s525 + $0xc0] sm:$0xff]
        %v551 = vld [vmem:[%s525 + $0xc8] sm:$0xff]
        %v552 = vld [vmem:[%s525 + $0xd0] sm:$0xff]
        %v553 = vld [vmem:[%s525 + $0xd8] sm:$0xff]
        %v554 = vld [vmem:[%s525 + $0xe0] sm:$0xff]
        %v555 = vld [vmem:[%s525 + $0xe8] sm:$0xff]
        %v556 = vld [vmem:[%s525 + $0xf0] sm:$0xff]
        %v557 = vld [vmem:[%s525 + $0xf8] sm:$0xff]
        %v558 = vld [vmem:[%s525 + $0x100] sm:$0xff]
        %v559 = vld [vmem:[%s525 + $0x108] sm:$0xff]
        %v560 = vld [vmem:[%s525 + $0x110] sm:$0xff]
        %v561 = vld [vmem:[%s525 + $0x118] sm:$0xff]
        %v562 = vld [vmem:[%s525 + $0x120] sm:$0xff]
        %v563 = vld [vmem:[%s525 + $0x128] sm:$0xff]
        %v564 = vld [vmem:[%s525 + $0x130] sm:$0xff]
        %v565 = vld [vmem:[%s525 + $0x138] sm:$0xff]
        %v566 = vld [vmem:[%s525 + $0x140] sm:$0xff]
        %v567 = vld [vmem:[%s525 + $0x148] sm:$0xff]
        %v568 = vld [vmem:[%s525 + $0x150] sm:$0xff]
        %v569 = vld [vmem:[%s525 + $0x158] sm:$0xff]
        %v570 = vld [vmem:[%s525 + $0x160] sm:$0xff]
        %v571 = vld [vmem:[%s525 + $0x168] sm:$0xff]
        %v572 = vld [vmem:[%s525 + $0x170] sm:$0xff]
        %v573 = vld [vmem:[%s525 + $0x178] sm:$0xff]
        %s574 = scalar_lea.vmem %s2, 384
        %v575 = vld [vmem:[%s574] sm:$0xff]
        %v576 = vld [vmem:[%s574 + $0x8] sm:$0xff]
        %v577 = vld [vmem:[%s574 + $0x10] sm:$0xff]
        %v578 = vld [vmem:[%s574 + $0x18] sm:$0xff]
        %v579 = vld [vmem:[%s574 + $0x20] sm:$0xff]
        %v580 = vld [vmem:[%s574 + $0x28] sm:$0xff]
        %v581 = vld [vmem:[%s574 + $0x30] sm:$0xff]
        %v582 = vld [vmem:[%s574 + $0x38] sm:$0xff]
        %v583 = vld [vmem:[%s574 + $0x40] sm:$0xff]
        %v584 = vld [vmem:[%s574 + $0x48] sm:$0xff]
        %v585 = vld [vmem:[%s574 + $0x50] sm:$0xff]
        %v586 = vld [vmem:[%s574 + $0x58] sm:$0xff]
        %v587 = vld [vmem:[%s574 + $0x60] sm:$0xff]
        %v588 = vld [vmem:[%s574 + $0x68] sm:$0xff]
        %v589 = vld [vmem:[%s574 + $0x70] sm:$0xff]
        %v590 = vld [vmem:[%s574 + $0x78] sm:$0xff]
        %v591 = vld [vmem:[%s574 + $0x80] sm:$0xff]
        %v592 = vld [vmem:[%s574 + $0x88] sm:$0xff]
        %v593 = vld [vmem:[%s574 + $0x90] sm:$0xff]
        %v594 = vld [vmem:[%s574 + $0x98] sm:$0xff]
        %v595 = vld [vmem:[%s574 + $0xa0] sm:$0xff]
        %v596 = vld [vmem:[%s574 + $0xa8] sm:$0xff]
        %v597 = vld [vmem:[%s574 + $0xb0] sm:$0xff]
        %v598 = vld [vmem:[%s574 + $0xb8] sm:$0xff]
        %v599 = vld [vmem:[%s574 + $0xc0] sm:$0xff]
        %v600 = vld [vmem:[%s574 + $0xc8] sm:$0xff]
        %v601 = vld [vmem:[%s574 + $0xd0] sm:$0xff]
        %v602 = vld [vmem:[%s574 + $0xd8] sm:$0xff]
        %v603 = vld [vmem:[%s574 + $0xe0] sm:$0xff]
        %v604 = vld [vmem:[%s574 + $0xe8] sm:$0xff]
        %v605 = vld [vmem:[%s574 + $0xf0] sm:$0xff]
        %v606 = vld [vmem:[%s574 + $0xf8] sm:$0xff]
        %v607 = vld [vmem:[%s574 + $0x100] sm:$0xff]
        %v608 = vld [vmem:[%s574 + $0x108] sm:$0xff]
        %v609 = vld [vmem:[%s574 + $0x110] sm:$0xff]
        %v610 = vld [vmem:[%s574 + $0x118] sm:$0xff]
        %v611 = vld [vmem:[%s574 + $0x120] sm:$0xff]
        %v612 = vld [vmem:[%s574 + $0x128] sm:$0xff]
        %v613 = vld [vmem:[%s574 + $0x130] sm:$0xff]
        %v614 = vld [vmem:[%s574 + $0x138] sm:$0xff]
        %v615 = vld [vmem:[%s574 + $0x140] sm:$0xff]
        %v616 = vld [vmem:[%s574 + $0x148] sm:$0xff]
        %v617 = vld [vmem:[%s574 + $0x150] sm:$0xff]
        %v618 = vld [vmem:[%s574 + $0x158] sm:$0xff]
        %v619 = vld [vmem:[%s574 + $0x160] sm:$0xff]
        %v620 = vld [vmem:[%s574 + $0x168] sm:$0xff]
        %v621 = vld [vmem:[%s574 + $0x170] sm:$0xff]
        %v622 = vld [vmem:[%s574 + $0x178] sm:$0xff]
        %623 = vmatprep.subr.mxu0 0.0
        %624 = vmatpush1.msra.mxu0 %v590
        %625 = vmatprep.subr.mxu0 0.0
        %626 = vmatpush1.msra.mxu0 %v589
        %627 = vmatprep.subr.mxu0 0.0
        %628 = vmatpush1.msra.mxu0 %v588
        %629 = vmatprep.subr.mxu0 0.0
        %630 = vmatpush1.msra.mxu0 %v587
        %631 = vmatprep.subr.mxu0 0.0
        %632 = vmatpush1.msra.mxu0 %v586
        %633 = vmatprep.subr.mxu0 0.0
        %634 = vmatpush1.msra.mxu0 %v585
        %635 = vmatprep.subr.mxu0 0.0
        %636 = vmatpush1.msra.mxu0 %v584
        %637 = vmatprep.subr.mxu0 0.0
        %638 = vmatpush1.msra.mxu0 %v583
        %639 = vmatprep.subr.mxu0 0.0
        %640 = vmatpush1.msra.mxu0 %v582
        %641 = vmatprep.subr.mxu0 0.0
        %642 = vmatpush1.msra.mxu0 %v581
        %643 = vmatprep.subr.mxu0 0.0
        %644 = vmatpush1.msra.mxu0 %v580
        %645 = vmatprep.subr.mxu0 0.0
        %646 = vmatpush1.msra.mxu0 %v579
        %647 = vmatprep.subr.mxu0 0.0
        %648 = vmatpush1.msra.mxu0 %v578
        %649 = vmatprep.subr.mxu0 0.0
        %650 = vmatpush1.msra.mxu0 %v577
        %651 = vmatprep.subr.mxu0 0.0
        %652 = vmatpush1.msra.mxu0 %v576
        %653 = vmatprep.subr.mxu0 0.0
        %654 = vmatpush1.msra.mxu0 %v575
        %655 = vmatprep.subr.mxu0 0.0
        %656 = vmatpush2.msra.mxu0 %v606
        %657 = vmatprep.subr.mxu0 0.0
        %658 = vmatpush2.msra.mxu0 %v605
        %659 = vmatprep.subr.mxu0 0.0
        %660 = vmatpush2.msra.mxu0 %v604
        %661 = vmatprep.subr.mxu0 0.0
        %662 = vmatpush2.msra.mxu0 %v603
        %663 = vmatprep.subr.mxu0 0.0
        %664 = vmatpush2.msra.mxu0 %v602
        %665 = vmatprep.subr.mxu0 0.0
        %666 = vmatpush2.msra.mxu0 %v601
        %667 = vmatprep.subr.mxu0 0.0
        %668 = vmatpush2.msra.mxu0 %v600
        %669 = vmatprep.subr.mxu0 0.0
        %670 = vmatpush2.msra.mxu0 %v599
        %671 = vmatprep.subr.mxu0 0.0
        %672 = vmatpush2.msra.mxu0 %v598
        %673 = vmatprep.subr.mxu0 0.0
        %674 = vmatpush2.msra.mxu0 %v597
        %675 = vmatprep.subr.mxu0 0.0
        %676 = vmatpush2.msra.mxu0 %v596
        %677 = vmatprep.subr.mxu0 0.0
        %678 = vmatpush2.msra.mxu0 %v595
        %679 = vmatprep.subr.mxu0 0.0
        %680 = vmatpush2.msra.mxu0 %v594
        %681 = vmatprep.subr.mxu0 0.0
        %682 = vmatpush2.msra.mxu0 %v593
        %683 = vmatprep.subr.mxu0 0.0
        %684 = vmatpush2.msra.mxu0 %v592
        %685 = vmatprep.subr.mxu0 0.0
        %686 = vmatpush2.msra.mxu0 %v591
        %687 = vmatprep.mubr.f32.mxu0 %v527
        %688 = vmatmul.mubr.f32.gmra.mxu0 %v526
        %v689 = vpop.f32.mrf.mxu0
        %v690 = vadd.f32 0.0, %v689
        %v691 = vpop.f32.mrf.mxu0
        %692 = vmatprep.mubr.f32.mxu0 %v530
        %693 = vmatmul.mubr.f32.gmra.mxu0 %v529
        %v694 = vpop.f32.mrf.mxu0
        %v695 = vadd.f32 0.0, %v694
        %v696 = vpop.f32.mrf.mxu0
        %697 = vmatprep.mubr.f32.mxu0 %v533
        %698 = vmatmul.mubr.f32.gmra.mxu0 %v532
        %v699 = vpop.f32.mrf.mxu0
        %v700 = vadd.f32 0.0, %v699
        %v701 = vpop.f32.mrf.mxu0
        %702 = vmatprep.mubr.f32.mxu0 %v536
        %703 = vmatmul.mubr.f32.gmra.mxu0 %v535
        %v704 = vpop.f32.mrf.mxu0
        %v705 = vadd.f32 0.0, %v704
        %v706 = vpop.f32.mrf.mxu0
        %707 = vmatprep.mubr.f32.mxu0 %v539
        %708 = vmatmul.mubr.f32.gmra.mxu0 %v538
        %v709 = vpop.f32.mrf.mxu0
        %v710 = vadd.f32 0.0, %v709
        %v711 = vpop.f32.mrf.mxu0
        %712 = vmatprep.mubr.f32.mxu0 %v542
        %713 = vmatmul.mubr.f32.gmra.mxu0 %v541
        %v714 = vpop.f32.mrf.mxu0
        %v715 = vadd.f32 0.0, %v714
        %v716 = vpop.f32.mrf.mxu0
        %717 = vmatprep.mubr.f32.mxu0 %v545
        %718 = vmatmul.mubr.f32.gmra.mxu0 %v544
        %v719 = vpop.f32.mrf.mxu0
        %v720 = vadd.f32 0.0, %v719
        %v721 = vpop.f32.mrf.mxu0
        %722 = vmatprep.mubr.f32.mxu0 %v548
        %723 = vmatmul.mubr.f32.gmra.mxu0 %v547
        %v724 = vpop.f32.mrf.mxu0
        %v725 = vadd.f32 0.0, %v724
        %v726 = vpop.f32.mrf.mxu0
        %727 = vmatprep.mubr.f32.mxu0 %v551
        %728 = vmatmul.mubr.f32.gmra.mxu0 %v550
        %v729 = vpop.f32.mrf.mxu0
        %v730 = vadd.f32 0.0, %v729
        %v731 = vpop.f32.mrf.mxu0
        %732 = vmatprep.mubr.f32.mxu0 %v554
        %733 = vmatmul.mubr.f32.gmra.mxu0 %v553
        %v734 = vpop.f32.mrf.mxu0
        %v735 = vadd.f32 0.0, %v734
        %v736 = vpop.f32.mrf.mxu0
        %737 = vmatprep.mubr.f32.mxu0 %v557
        %738 = vmatmul.mubr.f32.gmra.mxu0 %v556
        %v739 = vpop.f32.mrf.mxu0
        %v740 = vadd.f32 0.0, %v739
        %v741 = vpop.f32.mrf.mxu0
        %742 = vmatprep.mubr.f32.mxu0 %v560
        %743 = vmatmul.mubr.f32.gmra.mxu0 %v559
        %v744 = vpop.f32.mrf.mxu0
        %v745 = vadd.f32 0.0, %v744
        %v746 = vpop.f32.mrf.mxu0
        %747 = vmatprep.mubr.f32.mxu0 %v563
        %748 = vmatmul.mubr.f32.gmra.mxu0 %v562
        %v749 = vpop.f32.mrf.mxu0
        %v750 = vadd.f32 0.0, %v749
        %v751 = vpop.f32.mrf.mxu0
        %752 = vmatprep.mubr.f32.mxu0 %v566
        %753 = vmatmul.mubr.f32.gmra.mxu0 %v565
        %v754 = vpop.f32.mrf.mxu0
        %v755 = vadd.f32 0.0, %v754
        %v756 = vpop.f32.mrf.mxu0
        %757 = vmatprep.mubr.f32.mxu0 %v569
        %758 = vmatmul.mubr.f32.gmra.mxu0 %v568
        %v759 = vpop.f32.mrf.mxu0
        %v760 = vadd.f32 0.0, %v759
        %v761 = vpop.f32.mrf.mxu0
        %762 = vmatprep.mubr.f32.mxu0 %v572
        %763 = vmatmul.mubr.f32.gmra.mxu0 %v571
        %v764 = vpop.f32.mrf.mxu0
        %v765 = vadd.f32 0.0, %v764
        %v766 = vpop.f32.mrf.mxu0
        %767 = vdwg.mxu0
        %768 = vmatprep.subr.mxu0 0.0
        %769 = vmatpush1.msra.mxu0 %v622
        %770 = vmatprep.subr.mxu0 0.0
        %771 = vmatpush1.msra.mxu0 %v621
        %772 = vmatprep.subr.mxu0 0.0
        %773 = vmatpush1.msra.mxu0 %v620
        %774 = vmatprep.subr.mxu0 0.0
        %775 = vmatpush1.msra.mxu0 %v619
        %776 = vmatprep.subr.mxu0 0.0
        %777 = vmatpush1.msra.mxu0 %v618
        %778 = vmatprep.subr.mxu0 0.0
        %779 = vmatpush1.msra.mxu0 %v617
        %780 = vmatprep.subr.mxu0 0.0
        %781 = vmatpush1.msra.mxu0 %v616
        %782 = vmatprep.subr.mxu0 0.0
        %783 = vmatpush1.msra.mxu0 %v615
        %784 = vmatprep.subr.mxu0 0.0
        %785 = vmatpush1.msra.mxu0 %v614
        %786 = vmatprep.subr.mxu0 0.0
        %787 = vmatpush1.msra.mxu0 %v613
        %788 = vmatprep.subr.mxu0 0.0
        %789 = vmatpush1.msra.mxu0 %v612
        %790 = vmatprep.subr.mxu0 0.0
        %791 = vmatpush1.msra.mxu0 %v611
        %792 = vmatprep.subr.mxu0 0.0
        %793 = vmatpush1.msra.mxu0 %v610
        %794 = vmatprep.subr.mxu0 0.0
        %795 = vmatpush1.msra.mxu0 %v609
        %796 = vmatprep.subr.mxu0 0.0
        %797 = vmatpush1.msra.mxu0 %v608
        %798 = vmatprep.subr.mxu0 0.0
        %799 = vmatpush1.msra.mxu0 %v607
        %800 = vmatprep.subr.mxu0 0.0
        %801 = vmatpush2.msra.mxu0 0.0
        %802 = vmatprep.subr.mxu0 0.0
        %803 = vmatpush2.msra.mxu0 0.0
        %804 = vmatprep.subr.mxu0 0.0
        %805 = vmatpush2.msra.mxu0 0.0
        %806 = vmatprep.subr.mxu0 0.0
        %807 = vmatpush2.msra.mxu0 0.0
        %808 = vmatprep.subr.mxu0 0.0
        %809 = vmatpush2.msra.mxu0 0.0
        %810 = vmatprep.subr.mxu0 0.0
        %811 = vmatpush2.msra.mxu0 0.0
        %812 = vmatprep.subr.mxu0 0.0
        %813 = vmatpush2.msra.mxu0 0.0
        %814 = vmatprep.subr.mxu0 0.0
        %815 = vmatpush2.msra.mxu0 0.0
        %816 = vmatprep.subr.mxu0 0.0
        %817 = vmatpush2.msra.mxu0 0.0
        %818 = vmatprep.subr.mxu0 0.0
        %819 = vmatpush2.msra.mxu0 0.0
        %820 = vmatprep.subr.mxu0 0.0
        %821 = vmatpush2.msra.mxu0 0.0
        %822 = vmatprep.subr.mxu0 0.0
        %823 = vmatpush2.msra.mxu0 0.0
        %824 = vmatprep.subr.mxu0 0.0
        %825 = vmatpush2.msra.mxu0 0.0
        %826 = vmatprep.subr.mxu0 0.0
        %827 = vmatpush2.msra.mxu0 0.0
        %828 = vmatprep.subr.mxu0 0.0
        %829 = vmatpush2.msra.mxu0 0.0
        %830 = vmatprep.subr.mxu0 0.0
        %831 = vmatpush2.msra.mxu0 0.0
        %832 = vmatprep.mubr.f32.mxu0 0.0
        %833 = vmatmul.mubr.f32.gmra.mxu0 %v528
        %v834 = vpop.f32.mrf.mxu0
        %v835 = vadd.f32 %v690, %v834
        %v836 = vpop.f32.mrf.mxu0
        %837 = vmatprep.mubr.f32.mxu0 0.0
        %838 = vmatmul.mubr.f32.gmra.mxu0 %v531
        %v839 = vpop.f32.mrf.mxu0
        %v840 = vadd.f32 %v695, %v839
        %v841 = vpop.f32.mrf.mxu0
        %842 = vmatprep.mubr.f32.mxu0 0.0
        %843 = vmatmul.mubr.f32.gmra.mxu0 %v534
        %v844 = vpop.f32.mrf.mxu0
        %v845 = vadd.f32 %v700, %v844
        %v846 = vpop.f32.mrf.mxu0
        %847 = vmatprep.mubr.f32.mxu0 0.0
        %848 = vmatmul.mubr.f32.gmra.mxu0 %v537
        %v849 = vpop.f32.mrf.mxu0
        %v850 = vadd.f32 %v705, %v849
        %v851 = vpop.f32.mrf.mxu0
        %852 = vmatprep.mubr.f32.mxu0 0.0
        %853 = vmatmul.mubr.f32.gmra.mxu0 %v540
        %v854 = vpop.f32.mrf.mxu0
        %v855 = vadd.f32 %v710, %v854
        %v856 = vpop.f32.mrf.mxu0
        %857 = vmatprep.mubr.f32.mxu0 0.0
        %858 = vmatmul.mubr.f32.gmra.mxu0 %v543
        %v859 = vpop.f32.mrf.mxu0
        %v860 = vadd.f32 %v715, %v859
        %v861 = vpop.f32.mrf.mxu0
        %862 = vmatprep.mubr.f32.mxu0 0.0
        %863 = vmatmul.mubr.f32.gmra.mxu0 %v546
        %v864 = vpop.f32.mrf.mxu0
        %v865 = vadd.f32 %v720, %v864
        %v866 = vpop.f32.mrf.mxu0
        %867 = vmatprep.mubr.f32.mxu0 0.0
        %868 = vmatmul.mubr.f32.gmra.mxu0 %v549
        %v869 = vpop.f32.mrf.mxu0
        %v870 = vadd.f32 %v725, %v869
        %v871 = vpop.f32.mrf.mxu0
        %872 = vmatprep.mubr.f32.mxu0 0.0
        %873 = vmatmul.mubr.f32.gmra.mxu0 %v552
        %v874 = vpop.f32.mrf.mxu0
        %v875 = vadd.f32 %v730, %v874
        %v876 = vpop.f32.mrf.mxu0
        %877 = vmatprep.mubr.f32.mxu0 0.0
        %878 = vmatmul.mubr.f32.gmra.mxu0 %v555
        %v879 = vpop.f32.mrf.mxu0
        %v880 = vadd.f32 %v735, %v879
        %v881 = vpop.f32.mrf.mxu0
        %882 = vmatprep.mubr.f32.mxu0 0.0
        %883 = vmatmul.mubr.f32.gmra.mxu0 %v558
        %v884 = vpop.f32.mrf.mxu0
        %v885 = vadd.f32 %v740, %v884
        %v886 = vpop.f32.mrf.mxu0
        %887 = vmatprep.mubr.f32.mxu0 0.0
        %888 = vmatmul.mubr.f32.gmra.mxu0 %v561
        %v889 = vpop.f32.mrf.mxu0
        %v890 = vadd.f32 %v745, %v889
        %v891 = vpop.f32.mrf.mxu0
        %892 = vmatprep.mubr.f32.mxu0 0.0
        %893 = vmatmul.mubr.f32.gmra.mxu0 %v564
        %v894 = vpop.f32.mrf.mxu0
        %v895 = vadd.f32 %v750, %v894
        %v896 = vpop.f32.mrf.mxu0
        %897 = vmatprep.mubr.f32.mxu0 0.0
        %898 = vmatmul.mubr.f32.gmra.mxu0 %v567
        %v899 = vpop.f32.mrf.mxu0
        %v900 = vadd.f32 %v755, %v899
        %v901 = vpop.f32.mrf.mxu0
        %902 = vmatprep.mubr.f32.mxu0 0.0
        %903 = vmatmul.mubr.f32.gmra.mxu0 %v570
        %v904 = vpop.f32.mrf.mxu0
        %v905 = vadd.f32 %v760, %v904
        %v906 = vpop.f32.mrf.mxu0
        %907 = vmatprep.mubr.f32.mxu0 0.0
        %908 = vmatmul.mubr.f32.gmra.mxu0 %v573
        %v909 = vpop.f32.mrf.mxu0
        %v910 = vadd.f32 %v765, %v909
        %v911 = vpop.f32.mrf.mxu0
        %912 = vdwg.mxu0
        %913 = vmatprep.subr.mxu0 0.0
        %914 = vmatpush1.msra.mxu0 %v492
        %915 = vmatprep.subr.mxu0 0.0
        %916 = vmatpush1.msra.mxu0 %v491
        %917 = vmatprep.subr.mxu0 0.0
        %918 = vmatpush1.msra.mxu0 %v490
        %919 = vmatprep.subr.mxu0 0.0
        %920 = vmatpush1.msra.mxu0 %v489
        %921 = vmatprep.subr.mxu0 0.0
        %922 = vmatpush1.msra.mxu0 %v488
        %923 = vmatprep.subr.mxu0 0.0
        %924 = vmatpush1.msra.mxu0 %v487
        %925 = vmatprep.subr.mxu0 0.0
        %926 = vmatpush1.msra.mxu0 %v486
        %927 = vmatprep.subr.mxu0 0.0
        %928 = vmatpush1.msra.mxu0 %v485
        %929 = vmatprep.subr.mxu0 0.0
        %930 = vmatpush1.msra.mxu0 %v484
        %931 = vmatprep.subr.mxu0 0.0
        %932 = vmatpush1.msra.mxu0 %v483
        %933 = vmatprep.subr.mxu0 0.0
        %934 = vmatpush1.msra.mxu0 %v482
        %935 = vmatprep.subr.mxu0 0.0
        %936 = vmatpush1.msra.mxu0 %v481
        %937 = vmatprep.subr.mxu0 0.0
        %938 = vmatpush1.msra.mxu0 %v480
        %939 = vmatprep.subr.mxu0 0.0
        %940 = vmatpush1.msra.mxu0 %v479
        %941 = vmatprep.subr.mxu0 0.0
        %942 = vmatpush1.msra.mxu0 %v478
        %943 = vmatprep.subr.mxu0 0.0
        %944 = vmatpush1.msra.mxu0 %v477
        %945 = vmatprep.subr.mxu0 0.0
        %946 = vmatpush2.msra.mxu0 %v508
        %947 = vmatprep.subr.mxu0 0.0
        %948 = vmatpush2.msra.mxu0 %v507
        %949 = vmatprep.subr.mxu0 0.0
        %950 = vmatpush2.msra.mxu0 %v506
        %951 = vmatprep.subr.mxu0 0.0
        %952 = vmatpush2.msra.mxu0 %v505
        %953 = vmatprep.subr.mxu0 0.0
        %954 = vmatpush2.msra.mxu0 %v504
        %955 = vmatprep.subr.mxu0 0.0
        %956 = vmatpush2.msra.mxu0 %v503
        %957 = vmatprep.subr.mxu0 0.0
        %958 = vmatpush2.msra.mxu0 %v502
        %959 = vmatprep.subr.mxu0 0.0
        %960 = vmatpush2.msra.mxu0 %v501
        %961 = vmatprep.subr.mxu0 0.0
        %962 = vmatpush2.msra.mxu0 %v500
        %963 = vmatprep.subr.mxu0 0.0
        %964 = vmatpush2.msra.mxu0 %v499
        %965 = vmatprep.subr.mxu0 0.0
        %966 = vmatpush2.msra.mxu0 %v498
        %967 = vmatprep.subr.mxu0 0.0
        %968 = vmatpush2.msra.mxu0 %v497
        %969 = vmatprep.subr.mxu0 0.0
        %970 = vmatpush2.msra.mxu0 %v496
        %971 = vmatprep.subr.mxu0 0.0
        %972 = vmatpush2.msra.mxu0 %v495
        %973 = vmatprep.subr.mxu0 0.0
        %974 = vmatpush2.msra.mxu0 %v494
        %975 = vmatprep.subr.mxu0 0.0
        %976 = vmatpush2.msra.mxu0 %v493
        %977 = vmatprep.mubr.f32.mxu0 %v430
        %978 = vmatmul.mubr.f32.gmra.mxu0 %v429
        %v979 = vpop.f32.mrf.mxu0
        %v980 = vadd.f32 %v835, %v979
        %v981 = vpop.f32.mrf.mxu0
        %982 = vmatprep.mubr.f32.mxu0 %v433
        %983 = vmatmul.mubr.f32.gmra.mxu0 %v432
        %v984 = vpop.f32.mrf.mxu0
        %v985 = vadd.f32 %v840, %v984
        %v986 = vpop.f32.mrf.mxu0
        %987 = vmatprep.mubr.f32.mxu0 %v436
        %988 = vmatmul.mubr.f32.gmra.mxu0 %v435
        %v989 = vpop.f32.mrf.mxu0
        %v990 = vadd.f32 %v845, %v989
        %v991 = vpop.f32.mrf.mxu0
        %992 = vmatprep.mubr.f32.mxu0 %v439
        %993 = vmatmul.mubr.f32.gmra.mxu0 %v438
        %v994 = vpop.f32.mrf.mxu0
        %v995 = vadd.f32 %v850, %v994
        %v996 = vpop.f32.mrf.mxu0
        %997 = vmatprep.mubr.f32.mxu0 %v442
        %998 = vmatmul.mubr.f32.gmra.mxu0 %v441
        %v999 = vpop.f32.mrf.mxu0
        %v1000 = vadd.f32 %v855, %v999
        %v1001 = vpop.f32.mrf.mxu0
        %1002 = vmatprep.mubr.f32.mxu0 %v445
        %1003 = vmatmul.mubr.f32.gmra.mxu0 %v444
        %v1004 = vpop.f32.mrf.mxu0
        %v1005 = vadd.f32 %v860, %v1004
        %v1006 = vpop.f32.mrf.mxu0
        %1007 = vmatprep.mubr.f32.mxu0 %v448
        %1008 = vmatmul.mubr.f32.gmra.mxu0 %v447
        %v1009 = vpop.f32.mrf.mxu0
        %v1010 = vadd.f32 %v865, %v1009
        %v1011 = vpop.f32.mrf.mxu0
        %1012 = vmatprep.mubr.f32.mxu0 %v451
        %1013 = vmatmul.mubr.f32.gmra.mxu0 %v450
        %v1014 = vpop.f32.mrf.mxu0
        %v1015 = vadd.f32 %v870, %v1014
        %v1016 = vpop.f32.mrf.mxu0
        %1017 = vmatprep.mubr.f32.mxu0 %v454
        %1018 = vmatmul.mubr.f32.gmra.mxu0 %v453
        %v1019 = vpop.f32.mrf.mxu0
        %v1020 = vadd.f32 %v875, %v1019
        %v1021 = vpop.f32.mrf.mxu0
        %1022 = vmatprep.mubr.f32.mxu0 %v457
        %1023 = vmatmul.mubr.f32.gmra.mxu0 %v456
        %v1024 = vpop.f32.mrf.mxu0
        %v1025 = vadd.f32 %v880, %v1024
        %v1026 = vpop.f32.mrf.mxu0
        %1027 = vmatprep.mubr.f32.mxu0 %v460
        %1028 = vmatmul.mubr.f32.gmra.mxu0 %v459
        %v1029 = vpop.f32.mrf.mxu0
        %v1030 = vadd.f32 %v885, %v1029
        %v1031 = vpop.f32.mrf.mxu0
        %1032 = vmatprep.mubr.f32.mxu0 %v463
        %1033 = vmatmul.mubr.f32.gmra.mxu0 %v462
        %v1034 = vpop.f32.mrf.mxu0
        %v1035 = vadd.f32 %v890, %v1034
        %v1036 = vpop.f32.mrf.mxu0
        %1037 = vmatprep.mubr.f32.mxu0 %v466
        %1038 = vmatmul.mubr.f32.gmra.mxu0 %v465
        %v1039 = vpop.f32.mrf.mxu0
        %v1040 = vadd.f32 %v895, %v1039
        %v1041 = vpop.f32.mrf.mxu0
        %1042 = vmatprep.mubr.f32.mxu0 %v469
        %1043 = vmatmul.mubr.f32.gmra.mxu0 %v468
        %v1044 = vpop.f32.mrf.mxu0
        %v1045 = vadd.f32 %v900, %v1044
        %v1046 = vpop.f32.mrf.mxu0
        %1047 = vmatprep.mubr.f32.mxu0 %v472
        %1048 = vmatmul.mubr.f32.gmra.mxu0 %v471
        %v1049 = vpop.f32.mrf.mxu0
        %v1050 = vadd.f32 %v905, %v1049
        %v1051 = vpop.f32.mrf.mxu0
        %1052 = vmatprep.mubr.f32.mxu0 %v475
        %1053 = vmatmul.mubr.f32.gmra.mxu0 %v474
        %v1054 = vpop.f32.mrf.mxu0
        %v1055 = vadd.f32 %v910, %v1054
        %v1056 = vpop.f32.mrf.mxu0
        %1057 = vdwg.mxu0
        %1058 = vmatprep.subr.mxu0 0.0
        %1059 = vmatpush1.msra.mxu0 %v524
        %1060 = vmatprep.subr.mxu0 0.0
        %1061 = vmatpush1.msra.mxu0 %v523
        %1062 = vmatprep.subr.mxu0 0.0
        %1063 = vmatpush1.msra.mxu0 %v522
        %1064 = vmatprep.subr.mxu0 0.0
        %1065 = vmatpush1.msra.mxu0 %v521
        %1066 = vmatprep.subr.mxu0 0.0
        %1067 = vmatpush1.msra.mxu0 %v520
        %1068 = vmatprep.subr.mxu0 0.0
        %1069 = vmatpush1.msra.mxu0 %v519
        %1070 = vmatprep.subr.mxu0 0.0
        %1071 = vmatpush1.msra.mxu0 %v518
        %1072 = vmatprep.subr.mxu0 0.0
        %1073 = vmatpush1.msra.mxu0 %v517
        %1074 = vmatprep.subr.mxu0 0.0
        %1075 = vmatpush1.msra.mxu0 %v516
        %1076 = vmatprep.subr.mxu0 0.0
        %1077 = vmatpush1.msra.mxu0 %v515
        %1078 = vmatprep.subr.mxu0 0.0
        %1079 = vmatpush1.msra.mxu0 %v514
        %1080 = vmatprep.subr.mxu0 0.0
        %1081 = vmatpush1.msra.mxu0 %v513
        %1082 = vmatprep.subr.mxu0 0.0
        %1083 = vmatpush1.msra.mxu0 %v512
        %1084 = vmatprep.subr.mxu0 0.0
        %1085 = vmatpush1.msra.mxu0 %v511
        %1086 = vmatprep.subr.mxu0 0.0
        %1087 = vmatpush1.msra.mxu0 %v510
        %1088 = vmatprep.subr.mxu0 0.0
        %1089 = vmatpush1.msra.mxu0 %v509
        %1090 = vmatprep.subr.mxu0 0.0
        %1091 = vmatpush2.msra.mxu0 0.0
        %1092 = vmatprep.subr.mxu0 0.0
        %1093 = vmatpush2.msra.mxu0 0.0
        %1094 = vmatprep.subr.mxu0 0.0
        %1095 = vmatpush2.msra.mxu0 0.0
        %1096 = vmatprep.subr.mxu0 0.0
        %1097 = vmatpush2.msra.mxu0 0.0
        %1098 = vmatprep.subr.mxu0 0.0
        %1099 = vmatpush2.msra.mxu0 0.0
        %1100 = vmatprep.subr.mxu0 0.0
        %1101 = vmatpush2.msra.mxu0 0.0
        %1102 = vmatprep.subr.mxu0 0.0
        %1103 = vmatpush2.msra.mxu0 0.0
        %1104 = vmatprep.subr.mxu0 0.0
        %1105 = vmatpush2.msra.mxu0 0.0
        %1106 = vmatprep.subr.mxu0 0.0
        %1107 = vmatpush2.msra.mxu0 0.0
        %1108 = vmatprep.subr.mxu0 0.0
        %1109 = vmatpush2.msra.mxu0 0.0
        %1110 = vmatprep.subr.mxu0 0.0
        %1111 = vmatpush2.msra.mxu0 0.0
        %1112 = vmatprep.subr.mxu0 0.0
        %1113 = vmatpush2.msra.mxu0 0.0
        %1114 = vmatprep.subr.mxu0 0.0
        %1115 = vmatpush2.msra.mxu0 0.0
        %1116 = vmatprep.subr.mxu0 0.0
        %1117 = vmatpush2.msra.mxu0 0.0
        %1118 = vmatprep.subr.mxu0 0.0
        %1119 = vmatpush2.msra.mxu0 0.0
        %1120 = vmatprep.subr.mxu0 0.0
        %1121 = vmatpush2.msra.mxu0 0.0
        %1122 = vmatprep.mubr.f32.mxu0 0.0
        %1123 = vmatmul.mubr.f32.gmra.mxu0 %v431
        %v1124 = vpop.f32.mrf.mxu0
        %v1125 = vadd.f32 %v980, %v1124
        %v1126 = vpop.f32.mrf.mxu0
        %1127 = vmatprep.mubr.f32.mxu0 0.0
        %1128 = vmatmul.mubr.f32.gmra.mxu0 %v434
        %v1129 = vpop.f32.mrf.mxu0
        %v1130 = vadd.f32 %v985, %v1129
        %v1131 = vpop.f32.mrf.mxu0
        %1132 = vmatprep.mubr.f32.mxu0 0.0
        %1133 = vmatmul.mubr.f32.gmra.mxu0 %v437
        %v1134 = vpop.f32.mrf.mxu0
        %v1135 = vadd.f32 %v990, %v1134
        %v1136 = vpop.f32.mrf.mxu0
        %1137 = vmatprep.mubr.f32.mxu0 0.0
        %1138 = vmatmul.mubr.f32.gmra.mxu0 %v440
        %v1139 = vpop.f32.mrf.mxu0
        %v1140 = vadd.f32 %v995, %v1139
        %v1141 = vpop.f32.mrf.mxu0
        %1142 = vmatprep.mubr.f32.mxu0 0.0
        %1143 = vmatmul.mubr.f32.gmra.mxu0 %v443
        %v1144 = vpop.f32.mrf.mxu0
        %v1145 = vadd.f32 %v1000, %v1144
        %v1146 = vpop.f32.mrf.mxu0
        %1147 = vmatprep.mubr.f32.mxu0 0.0
        %1148 = vmatmul.mubr.f32.gmra.mxu0 %v446
        %v1149 = vpop.f32.mrf.mxu0
        %v1150 = vadd.f32 %v1005, %v1149
        %v1151 = vpop.f32.mrf.mxu0
        %1152 = vmatprep.mubr.f32.mxu0 0.0
        %1153 = vmatmul.mubr.f32.gmra.mxu0 %v449
        %v1154 = vpop.f32.mrf.mxu0
        %v1155 = vadd.f32 %v1010, %v1154
        %v1156 = vpop.f32.mrf.mxu0
        %1157 = vmatprep.mubr.f32.mxu0 0.0
        %1158 = vmatmul.mubr.f32.gmra.mxu0 %v452
        %v1159 = vpop.f32.mrf.mxu0
        %v1160 = vadd.f32 %v1015, %v1159
        %v1161 = vpop.f32.mrf.mxu0
        %1162 = vmatprep.mubr.f32.mxu0 0.0
        %1163 = vmatmul.mubr.f32.gmra.mxu0 %v455
        %v1164 = vpop.f32.mrf.mxu0
        %v1165 = vadd.f32 %v1020, %v1164
        %v1166 = vpop.f32.mrf.mxu0
        %1167 = vmatprep.mubr.f32.mxu0 0.0
        %1168 = vmatmul.mubr.f32.gmra.mxu0 %v458
        %v1169 = vpop.f32.mrf.mxu0
        %v1170 = vadd.f32 %v1025, %v1169
        %v1171 = vpop.f32.mrf.mxu0
        %1172 = vmatprep.mubr.f32.mxu0 0.0
        %1173 = vmatmul.mubr.f32.gmra.mxu0 %v461
        %v1174 = vpop.f32.mrf.mxu0
        %v1175 = vadd.f32 %v1030, %v1174
        %v1176 = vpop.f32.mrf.mxu0
        %1177 = vmatprep.mubr.f32.mxu0 0.0
        %1178 = vmatmul.mubr.f32.gmra.mxu0 %v464
        %v1179 = vpop.f32.mrf.mxu0
        %v1180 = vadd.f32 %v1035, %v1179
        %v1181 = vpop.f32.mrf.mxu0
        %1182 = vmatprep.mubr.f32.mxu0 0.0
        %1183 = vmatmul.mubr.f32.gmra.mxu0 %v467
        %v1184 = vpop.f32.mrf.mxu0
        %v1185 = vadd.f32 %v1040, %v1184
        %v1186 = vpop.f32.mrf.mxu0
        %1187 = vmatprep.mubr.f32.mxu0 0.0
        %1188 = vmatmul.mubr.f32.gmra.mxu0 %v470
        %v1189 = vpop.f32.mrf.mxu0
        %v1190 = vadd.f32 %v1045, %v1189
        %v1191 = vpop.f32.mrf.mxu0
        %1192 = vmatprep.mubr.f32.mxu0 0.0
        %1193 = vmatmul.mubr.f32.gmra.mxu0 %v473
        %v1194 = vpop.f32.mrf.mxu0
        %v1195 = vadd.f32 %v1050, %v1194
        %v1196 = vpop.f32.mrf.mxu0
        %1197 = vmatprep.mubr.f32.mxu0 0.0
        %1198 = vmatmul.mubr.f32.gmra.mxu0 %v476
        %v1199 = vpop.f32.mrf.mxu0
        %v1200 = vadd.f32 %v1055, %v1199
        %v1201 = vpop.f32.mrf.mxu0
        %1202 = vdwg.mxu0
        %s1203 = scalar_lea.vmem [#allocation2], 96
        %v1204 = vld [vmem:[%s1203] sm:$0xff]
        %v1205 = vld [vmem:[%s1203 + $0x8] sm:$0xff]
        %v1206 = vld [vmem:[%s1203 + $0x10] sm:$0xff]
        %v1207 = vld [vmem:[%s1203 + $0x18] sm:$0xff]
        %v1208 = vld [vmem:[%s1203 + $0x20] sm:$0xff]
        %v1209 = vld [vmem:[%s1203 + $0x28] sm:$0xff]
        %v1210 = vld [vmem:[%s1203 + $0x30] sm:$0xff]
        %v1211 = vld [vmem:[%s1203 + $0x38] sm:$0xff]
        %v1212 = vld [vmem:[%s1203 + $0x40] sm:$0xff]
        %v1213 = vld [vmem:[%s1203 + $0x48] sm:$0xff]
        %v1214 = vld [vmem:[%s1203 + $0x50] sm:$0xff]
        %v1215 = vld [vmem:[%s1203 + $0x58] sm:$0xff]
        %v1216 = vld [vmem:[%s1203 + $0x60] sm:$0xff]
        %v1217 = vld [vmem:[%s1203 + $0x68] sm:$0xff]
        %v1218 = vld [vmem:[%s1203 + $0x70] sm:$0xff]
        %v1219 = vld [vmem:[%s1203 + $0x78] sm:$0xff]
        %v1220 = vld [vmem:[%s1203 + $0x80] sm:$0xff]
        %v1221 = vld [vmem:[%s1203 + $0x88] sm:$0xff]
        %v1222 = vld [vmem:[%s1203 + $0x90] sm:$0xff]
        %v1223 = vld [vmem:[%s1203 + $0x98] sm:$0xff]
        %v1224 = vld [vmem:[%s1203 + $0xa0] sm:$0xff]
        %v1225 = vld [vmem:[%s1203 + $0xa8] sm:$0xff]
        %v1226 = vld [vmem:[%s1203 + $0xb0] sm:$0xff]
        %v1227 = vld [vmem:[%s1203 + $0xb8] sm:$0xff]
        %v1228 = vld [vmem:[%s1203 + $0xc0] sm:$0xff]
        %v1229 = vld [vmem:[%s1203 + $0xc8] sm:$0xff]
        %v1230 = vld [vmem:[%s1203 + $0xd0] sm:$0xff]
        %v1231 = vld [vmem:[%s1203 + $0xd8] sm:$0xff]
        %v1232 = vld [vmem:[%s1203 + $0xe0] sm:$0xff]
        %v1233 = vld [vmem:[%s1203 + $0xe8] sm:$0xff]
        %v1234 = vld [vmem:[%s1203 + $0xf0] sm:$0xff]
        %v1235 = vld [vmem:[%s1203 + $0xf8] sm:$0xff]
        %v1236 = vld [vmem:[%s1203 + $0x100] sm:$0xff]
        %v1237 = vld [vmem:[%s1203 + $0x108] sm:$0xff]
        %v1238 = vld [vmem:[%s1203 + $0x110] sm:$0xff]
        %v1239 = vld [vmem:[%s1203 + $0x118] sm:$0xff]
        %v1240 = vld [vmem:[%s1203 + $0x120] sm:$0xff]
        %v1241 = vld [vmem:[%s1203 + $0x128] sm:$0xff]
        %v1242 = vld [vmem:[%s1203 + $0x130] sm:$0xff]
        %v1243 = vld [vmem:[%s1203 + $0x138] sm:$0xff]
        %v1244 = vld [vmem:[%s1203 + $0x140] sm:$0xff]
        %v1245 = vld [vmem:[%s1203 + $0x148] sm:$0xff]
        %v1246 = vld [vmem:[%s1203 + $0x150] sm:$0xff]
        %v1247 = vld [vmem:[%s1203 + $0x158] sm:$0xff]
        %v1248 = vld [vmem:[%s1203 + $0x160] sm:$0xff]
        %v1249 = vld [vmem:[%s1203 + $0x168] sm:$0xff]
        %v1250 = vld [vmem:[%s1203 + $0x170] sm:$0xff]
        %v1251 = vld [vmem:[%s1203 + $0x178] sm:$0xff]
        %s1252 = scalar_lea.vmem %s2, 768
        %v1253 = vld [vmem:[%s1252] sm:$0xff]
        %v1254 = vld [vmem:[%s1252 + $0x8] sm:$0xff]
        %v1255 = vld [vmem:[%s1252 + $0x10] sm:$0xff]
        %v1256 = vld [vmem:[%s1252 + $0x18] sm:$0xff]
        %v1257 = vld [vmem:[%s1252 + $0x20] sm:$0xff]
        %v1258 = vld [vmem:[%s1252 + $0x28] sm:$0xff]
        %v1259 = vld [vmem:[%s1252 + $0x30] sm:$0xff]
        %v1260 = vld [vmem:[%s1252 + $0x38] sm:$0xff]
        %v1261 = vld [vmem:[%s1252 + $0x40] sm:$0xff]
        %v1262 = vld [vmem:[%s1252 + $0x48] sm:$0xff]
        %v1263 = vld [vmem:[%s1252 + $0x50] sm:$0xff]
        %v1264 = vld [vmem:[%s1252 + $0x58] sm:$0xff]
        %v1265 = vld [vmem:[%s1252 + $0x60] sm:$0xff]
        %v1266 = vld [vmem:[%s1252 + $0x68] sm:$0xff]
        %v1267 = vld [vmem:[%s1252 + $0x70] sm:$0xff]
        %v1268 = vld [vmem:[%s1252 + $0x78] sm:$0xff]
        %v1269 = vld [vmem:[%s1252 + $0x80] sm:$0xff]
        %v1270 = vld [vmem:[%s1252 + $0x88] sm:$0xff]
        %v1271 = vld [vmem:[%s1252 + $0x90] sm:$0xff]
        %v1272 = vld [vmem:[%s1252 + $0x98] sm:$0xff]
        %v1273 = vld [vmem:[%s1252 + $0xa0] sm:$0xff]
        %v1274 = vld [vmem:[%s1252 + $0xa8] sm:$0xff]
        %v1275 = vld [vmem:[%s1252 + $0xb0] sm:$0xff]
        %v1276 = vld [vmem:[%s1252 + $0xb8] sm:$0xff]
        %v1277 = vld [vmem:[%s1252 + $0xc0] sm:$0xff]
        %v1278 = vld [vmem:[%s1252 + $0xc8] sm:$0xff]
        %v1279 = vld [vmem:[%s1252 + $0xd0] sm:$0xff]
        %v1280 = vld [vmem:[%s1252 + $0xd8] sm:$0xff]
        %v1281 = vld [vmem:[%s1252 + $0xe0] sm:$0xff]
        %v1282 = vld [vmem:[%s1252 + $0xe8] sm:$0xff]
        %v1283 = vld [vmem:[%s1252 + $0xf0] sm:$0xff]
        %v1284 = vld [vmem:[%s1252 + $0xf8] sm:$0xff]
        %v1285 = vld [vmem:[%s1252 + $0x100] sm:$0xff]
        %v1286 = vld [vmem:[%s1252 + $0x108] sm:$0xff]
        %v1287 = vld [vmem:[%s1252 + $0x110] sm:$0xff]
        %v1288 = vld [vmem:[%s1252 + $0x118] sm:$0xff]
        %v1289 = vld [vmem:[%s1252 + $0x120] sm:$0xff]
        %v1290 = vld [vmem:[%s1252 + $0x128] sm:$0xff]
        %v1291 = vld [vmem:[%s1252 + $0x130] sm:$0xff]
        %v1292 = vld [vmem:[%s1252 + $0x138] sm:$0xff]
        %v1293 = vld [vmem:[%s1252 + $0x140] sm:$0xff]
        %v1294 = vld [vmem:[%s1252 + $0x148] sm:$0xff]
        %v1295 = vld [vmem:[%s1252 + $0x150] sm:$0xff]
        %v1296 = vld [vmem:[%s1252 + $0x158] sm:$0xff]
        %v1297 = vld [vmem:[%s1252 + $0x160] sm:$0xff]
        %v1298 = vld [vmem:[%s1252 + $0x168] sm:$0xff]
        %v1299 = vld [vmem:[%s1252 + $0x170] sm:$0xff]
        %v1300 = vld [vmem:[%s1252 + $0x178] sm:$0xff]
        %1301 = vmatprep.subr.mxu0 0.0
        %1302 = vmatpush1.msra.mxu0 %v1268
        %1303 = vmatprep.subr.mxu0 0.0
        %1304 = vmatpush1.msra.mxu0 %v1267
        %1305 = vmatprep.subr.mxu0 0.0
        %1306 = vmatpush1.msra.mxu0 %v1266
        %1307 = vmatprep.subr.mxu0 0.0
        %1308 = vmatpush1.msra.mxu0 %v1265
        %1309 = vmatprep.subr.mxu0 0.0
        %1310 = vmatpush1.msra.mxu0 %v1264
        %1311 = vmatprep.subr.mxu0 0.0
        %1312 = vmatpush1.msra.mxu0 %v1263
        %1313 = vmatprep.subr.mxu0 0.0
        %1314 = vmatpush1.msra.mxu0 %v1262
        %1315 = vmatprep.subr.mxu0 0.0
        %1316 = vmatpush1.msra.mxu0 %v1261
        %1317 = vmatprep.subr.mxu0 0.0
        %1318 = vmatpush1.msra.mxu0 %v1260
        %1319 = vmatprep.subr.mxu0 0.0
        %1320 = vmatpush1.msra.mxu0 %v1259
        %1321 = vmatprep.subr.mxu0 0.0
        %1322 = vmatpush1.msra.mxu0 %v1258
        %1323 = vmatprep.subr.mxu0 0.0
        %1324 = vmatpush1.msra.mxu0 %v1257
        %1325 = vmatprep.subr.mxu0 0.0
        %1326 = vmatpush1.msra.mxu0 %v1256
        %1327 = vmatprep.subr.mxu0 0.0
        %1328 = vmatpush1.msra.mxu0 %v1255
        %1329 = vmatprep.subr.mxu0 0.0
        %1330 = vmatpush1.msra.mxu0 %v1254
        %1331 = vmatprep.subr.mxu0 0.0
        %1332 = vmatpush1.msra.mxu0 %v1253
        %1333 = vmatprep.subr.mxu0 0.0
        %1334 = vmatpush2.msra.mxu0 %v1284
        %1335 = vmatprep.subr.mxu0 0.0
        %1336 = vmatpush2.msra.mxu0 %v1283
        %1337 = vmatprep.subr.mxu0 0.0
        %1338 = vmatpush2.msra.mxu0 %v1282
        %1339 = vmatprep.subr.mxu0 0.0
        %1340 = vmatpush2.msra.mxu0 %v1281
        %1341 = vmatprep.subr.mxu0 0.0
        %1342 = vmatpush2.msra.mxu0 %v1280
        %1343 = vmatprep.subr.mxu0 0.0
        %1344 = vmatpush2.msra.mxu0 %v1279
        %1345 = vmatprep.subr.mxu0 0.0
        %1346 = vmatpush2.msra.mxu0 %v1278
        %1347 = vmatprep.subr.mxu0 0.0
        %1348 = vmatpush2.msra.mxu0 %v1277
        %1349 = vmatprep.subr.mxu0 0.0
        %1350 = vmatpush2.msra.mxu0 %v1276
        %1351 = vmatprep.subr.mxu0 0.0
        %1352 = vmatpush2.msra.mxu0 %v1275
        %1353 = vmatprep.subr.mxu0 0.0
        %1354 = vmatpush2.msra.mxu0 %v1274
        %1355 = vmatprep.subr.mxu0 0.0
        %1356 = vmatpush2.msra.mxu0 %v1273
        %1357 = vmatprep.subr.mxu0 0.0
        %1358 = vmatpush2.msra.mxu0 %v1272
        %1359 = vmatprep.subr.mxu0 0.0
        %1360 = vmatpush2.msra.mxu0 %v1271
        %1361 = vmatprep.subr.mxu0 0.0
        %1362 = vmatpush2.msra.mxu0 %v1270
        %1363 = vmatprep.subr.mxu0 0.0
        %1364 = vmatpush2.msra.mxu0 %v1269
        %1365 = vmatprep.mubr.f32.mxu0 %v1205
        %1366 = vmatmul.mubr.f32.gmra.mxu0 %v1204
        %v1367 = vpop.f32.mrf.mxu0
        %v1368 = vadd.f32 0.0, %v1367
        %v1369 = vpop.f32.mrf.mxu0
        %1370 = vmatprep.mubr.f32.mxu0 %v1208
        %1371 = vmatmul.mubr.f32.gmra.mxu0 %v1207
        %v1372 = vpop.f32.mrf.mxu0
        %v1373 = vadd.f32 0.0, %v1372
        %v1374 = vpop.f32.mrf.mxu0
        %1375 = vmatprep.mubr.f32.mxu0 %v1211
        %1376 = vmatmul.mubr.f32.gmra.mxu0 %v1210
        %v1377 = vpop.f32.mrf.mxu0
        %v1378 = vadd.f32 0.0, %v1377
        %v1379 = vpop.f32.mrf.mxu0
        %1380 = vmatprep.mubr.f32.mxu0 %v1214
        %1381 = vmatmul.mubr.f32.gmra.mxu0 %v1213
        %v1382 = vpop.f32.mrf.mxu0
        %v1383 = vadd.f32 0.0, %v1382
        %v1384 = vpop.f32.mrf.mxu0
        %1385 = vmatprep.mubr.f32.mxu0 %v1217
        %1386 = vmatmul.mubr.f32.gmra.mxu0 %v1216
        %v1387 = vpop.f32.mrf.mxu0
        %v1388 = vadd.f32 0.0, %v1387
        %v1389 = vpop.f32.mrf.mxu0
        %1390 = vmatprep.mubr.f32.mxu0 %v1220
        %1391 = vmatmul.mubr.f32.gmra.mxu0 %v1219
        %v1392 = vpop.f32.mrf.mxu0
        %v1393 = vadd.f32 0.0, %v1392
        %v1394 = vpop.f32.mrf.mxu0
        %1395 = vmatprep.mubr.f32.mxu0 %v1223
        %1396 = vmatmul.mubr.f32.gmra.mxu0 %v1222
        %v1397 = vpop.f32.mrf.mxu0
        %v1398 = vadd.f32 0.0, %v1397
        %v1399 = vpop.f32.mrf.mxu0
        %1400 = vmatprep.mubr.f32.mxu0 %v1226
        %1401 = vmatmul.mubr.f32.gmra.mxu0 %v1225
        %v1402 = vpop.f32.mrf.mxu0
        %v1403 = vadd.f32 0.0, %v1402
        %v1404 = vpop.f32.mrf.mxu0
        %1405 = vmatprep.mubr.f32.mxu0 %v1229
        %1406 = vmatmul.mubr.f32.gmra.mxu0 %v1228
        %v1407 = vpop.f32.mrf.mxu0
        %v1408 = vadd.f32 0.0, %v1407
        %v1409 = vpop.f32.mrf.mxu0
        %1410 = vmatprep.mubr.f32.mxu0 %v1232
        %1411 = vmatmul.mubr.f32.gmra.mxu0 %v1231
        %v1412 = vpop.f32.mrf.mxu0
        %v1413 = vadd.f32 0.0, %v1412
        %v1414 = vpop.f32.mrf.mxu0
        %1415 = vmatprep.mubr.f32.mxu0 %v1235
        %1416 = vmatmul.mubr.f32.gmra.mxu0 %v1234
        %v1417 = vpop.f32.mrf.mxu0
        %v1418 = vadd.f32 0.0, %v1417
        %v1419 = vpop.f32.mrf.mxu0
        %1420 = vmatprep.mubr.f32.mxu0 %v1238
        %1421 = vmatmul.mubr.f32.gmra.mxu0 %v1237
        %v1422 = vpop.f32.mrf.mxu0
        %v1423 = vadd.f32 0.0, %v1422
        %v1424 = vpop.f32.mrf.mxu0
        %1425 = vmatprep.mubr.f32.mxu0 %v1241
        %1426 = vmatmul.mubr.f32.gmra.mxu0 %v1240
        %v1427 = vpop.f32.mrf.mxu0
        %v1428 = vadd.f32 0.0, %v1427
        %v1429 = vpop.f32.mrf.mxu0
        %1430 = vmatprep.mubr.f32.mxu0 %v1244
        %1431 = vmatmul.mubr.f32.gmra.mxu0 %v1243
        %v1432 = vpop.f32.mrf.mxu0
        %v1433 = vadd.f32 0.0, %v1432
        %v1434 = vpop.f32.mrf.mxu0
        %1435 = vmatprep.mubr.f32.mxu0 %v1247
        %1436 = vmatmul.mubr.f32.gmra.mxu0 %v1246
        %v1437 = vpop.f32.mrf.mxu0
        %v1438 = vadd.f32 0.0, %v1437
        %v1439 = vpop.f32.mrf.mxu0
        %1440 = vmatprep.mubr.f32.mxu0 %v1250
        %1441 = vmatmul.mubr.f32.gmra.mxu0 %v1249
        %v1442 = vpop.f32.mrf.mxu0
        %v1443 = vadd.f32 0.0, %v1442
        %v1444 = vpop.f32.mrf.mxu0
        %1445 = vdwg.mxu0
        %1446 = vmatprep.subr.mxu0 0.0
        %1447 = vmatpush1.msra.mxu0 %v1300
        %1448 = vmatprep.subr.mxu0 0.0
        %1449 = vmatpush1.msra.mxu0 %v1299
        %1450 = vmatprep.subr.mxu0 0.0
        %1451 = vmatpush1.msra.mxu0 %v1298
        %1452 = vmatprep.subr.mxu0 0.0
        %1453 = vmatpush1.msra.mxu0 %v1297
        %1454 = vmatprep.subr.mxu0 0.0
        %1455 = vmatpush1.msra.mxu0 %v1296
        %1456 = vmatprep.subr.mxu0 0.0
        %1457 = vmatpush1.msra.mxu0 %v1295
        %1458 = vmatprep.subr.mxu0 0.0
        %1459 = vmatpush1.msra.mxu0 %v1294
        %1460 = vmatprep.subr.mxu0 0.0
        %1461 = vmatpush1.msra.mxu0 %v1293
        %1462 = vmatprep.subr.mxu0 0.0
        %1463 = vmatpush1.msra.mxu0 %v1292
        %1464 = vmatprep.subr.mxu0 0.0
        %1465 = vmatpush1.msra.mxu0 %v1291
        %1466 = vmatprep.subr.mxu0 0.0
        %1467 = vmatpush1.msra.mxu0 %v1290
        %1468 = vmatprep.subr.mxu0 0.0
        %1469 = vmatpush1.msra.mxu0 %v1289
        %1470 = vmatprep.subr.mxu0 0.0
        %1471 = vmatpush1.msra.mxu0 %v1288
        %1472 = vmatprep.subr.mxu0 0.0
        %1473 = vmatpush1.msra.mxu0 %v1287
        %1474 = vmatprep.subr.mxu0 0.0
        %1475 = vmatpush1.msra.mxu0 %v1286
        %1476 = vmatprep.subr.mxu0 0.0
        %1477 = vmatpush1.msra.mxu0 %v1285
        %1478 = vmatprep.subr.mxu0 0.0
        %1479 = vmatpush2.msra.mxu0 0.0
        %1480 = vmatprep.subr.mxu0 0.0
        %1481 = vmatpush2.msra.mxu0 0.0
        %1482 = vmatprep.subr.mxu0 0.0
        %1483 = vmatpush2.msra.mxu0 0.0
        %1484 = vmatprep.subr.mxu0 0.0
        %1485 = vmatpush2.msra.mxu0 0.0
        %1486 = vmatprep.subr.mxu0 0.0
        %1487 = vmatpush2.msra.mxu0 0.0
        %1488 = vmatprep.subr.mxu0 0.0
        %1489 = vmatpush2.msra.mxu0 0.0
        %1490 = vmatprep.subr.mxu0 0.0
        %1491 = vmatpush2.msra.mxu0 0.0
        %1492 = vmatprep.subr.mxu0 0.0
        %1493 = vmatpush2.msra.mxu0 0.0
        %1494 = vmatprep.subr.mxu0 0.0
        %1495 = vmatpush2.msra.mxu0 0.0
        %1496 = vmatprep.subr.mxu0 0.0
        %1497 = vmatpush2.msra.mxu0 0.0
        %1498 = vmatprep.subr.mxu0 0.0
        %1499 = vmatpush2.msra.mxu0 0.0
        %1500 = vmatprep.subr.mxu0 0.0
        %1501 = vmatpush2.msra.mxu0 0.0
        %1502 = vmatprep.subr.mxu0 0.0
        %1503 = vmatpush2.msra.mxu0 0.0
        %1504 = vmatprep.subr.mxu0 0.0
        %1505 = vmatpush2.msra.mxu0 0.0
        %1506 = vmatprep.subr.mxu0 0.0
        %1507 = vmatpush2.msra.mxu0 0.0
        %1508 = vmatprep.subr.mxu0 0.0
        %1509 = vmatpush2.msra.mxu0 0.0
        %1510 = vmatprep.mubr.f32.mxu0 0.0
        %1511 = vmatmul.mubr.f32.gmra.mxu0 %v1206
        %v1512 = vpop.f32.mrf.mxu0
        %v1513 = vadd.f32 %v1368, %v1512
        %v1514 = vpop.f32.mrf.mxu0
        %1515 = vmatprep.mubr.f32.mxu0 0.0
        %1516 = vmatmul.mubr.f32.gmra.mxu0 %v1209
        %v1517 = vpop.f32.mrf.mxu0
        %v1518 = vadd.f32 %v1373, %v1517
        %v1519 = vpop.f32.mrf.mxu0
        %1520 = vmatprep.mubr.f32.mxu0 0.0
        %1521 = vmatmul.mubr.f32.gmra.mxu0 %v1212
        %v1522 = vpop.f32.mrf.mxu0
        %v1523 = vadd.f32 %v1378, %v1522
        %v1524 = vpop.f32.mrf.mxu0
        %1525 = vmatprep.mubr.f32.mxu0 0.0
        %1526 = vmatmul.mubr.f32.gmra.mxu0 %v1215
        %v1527 = vpop.f32.mrf.mxu0
        %v1528 = vadd.f32 %v1383, %v1527
        %v1529 = vpop.f32.mrf.mxu0
        %1530 = vmatprep.mubr.f32.mxu0 0.0
        %1531 = vmatmul.mubr.f32.gmra.mxu0 %v1218
        %v1532 = vpop.f32.mrf.mxu0
        %v1533 = vadd.f32 %v1388, %v1532
        %v1534 = vpop.f32.mrf.mxu0
        %1535 = vmatprep.mubr.f32.mxu0 0.0
        %1536 = vmatmul.mubr.f32.gmra.mxu0 %v1221
        %v1537 = vpop.f32.mrf.mxu0
        %v1538 = vadd.f32 %v1393, %v1537
        %v1539 = vpop.f32.mrf.mxu0
        %1540 = vmatprep.mubr.f32.mxu0 0.0
        %1541 = vmatmul.mubr.f32.gmra.mxu0 %v1224
        %v1542 = vpop.f32.mrf.mxu0
        %v1543 = vadd.f32 %v1398, %v1542
        %v1544 = vpop.f32.mrf.mxu0
        %1545 = vmatprep.mubr.f32.mxu0 0.0
        %1546 = vmatmul.mubr.f32.gmra.mxu0 %v1227
        %v1547 = vpop.f32.mrf.mxu0
        %v1548 = vadd.f32 %v1403, %v1547
        %v1549 = vpop.f32.mrf.mxu0
        %1550 = vmatprep.mubr.f32.mxu0 0.0
        %1551 = vmatmul.mubr.f32.gmra.mxu0 %v1230
        %v1552 = vpop.f32.mrf.mxu0
        %v1553 = vadd.f32 %v1408, %v1552
        %v1554 = vpop.f32.mrf.mxu0
        %1555 = vmatprep.mubr.f32.mxu0 0.0
        %1556 = vmatmul.mubr.f32.gmra.mxu0 %v1233
        %v1557 = vpop.f32.mrf.mxu0
        %v1558 = vadd.f32 %v1413, %v1557
        %v1559 = vpop.f32.mrf.mxu0
        %1560 = vmatprep.mubr.f32.mxu0 0.0
        %1561 = vmatmul.mubr.f32.gmra.mxu0 %v1236
        %v1562 = vpop.f32.mrf.mxu0
        %v1563 = vadd.f32 %v1418, %v1562
        %v1564 = vpop.f32.mrf.mxu0
        %1565 = vmatprep.mubr.f32.mxu0 0.0
        %1566 = vmatmul.mubr.f32.gmra.mxu0 %v1239
        %v1567 = vpop.f32.mrf.mxu0
        %v1568 = vadd.f32 %v1423, %v1567
        %v1569 = vpop.f32.mrf.mxu0
        %1570 = vmatprep.mubr.f32.mxu0 0.0
        %1571 = vmatmul.mubr.f32.gmra.mxu0 %v1242
        %v1572 = vpop.f32.mrf.mxu0
        %v1573 = vadd.f32 %v1428, %v1572
        %v1574 = vpop.f32.mrf.mxu0
        %1575 = vmatprep.mubr.f32.mxu0 0.0
        %1576 = vmatmul.mubr.f32.gmra.mxu0 %v1245
        %v1577 = vpop.f32.mrf.mxu0
        %v1578 = vadd.f32 %v1433, %v1577
        %v1579 = vpop.f32.mrf.mxu0
        %1580 = vmatprep.mubr.f32.mxu0 0.0
        %1581 = vmatmul.mubr.f32.gmra.mxu0 %v1248
        %v1582 = vpop.f32.mrf.mxu0
        %v1583 = vadd.f32 %v1438, %v1582
        %v1584 = vpop.f32.mrf.mxu0
        %1585 = vmatprep.mubr.f32.mxu0 0.0
        %1586 = vmatmul.mubr.f32.gmra.mxu0 %v1251
        %v1587 = vpop.f32.mrf.mxu0
        %v1588 = vadd.f32 %v1443, %v1587
        %v1589 = vpop.f32.mrf.mxu0
        %1590 = vdwg.mxu0
        %v1591 = vadd.f32 %v1125, %v1513
        %v1592 = vadd.f32 %v1130, %v1518
        %v1593 = vadd.f32 %v1135, %v1523
        %v1594 = vadd.f32 %v1140, %v1528
        %v1595 = vadd.f32 %v1145, %v1533
        %v1596 = vadd.f32 %v1150, %v1538
        %v1597 = vadd.f32 %v1155, %v1543
        %v1598 = vadd.f32 %v1160, %v1548
        %v1599 = vadd.f32 %v1165, %v1553
        %v1600 = vadd.f32 %v1170, %v1558
        %v1601 = vadd.f32 %v1175, %v1563
        %v1602 = vadd.f32 %v1180, %v1568
        %v1603 = vadd.f32 %v1185, %v1573
        %v1604 = vadd.f32 %v1190, %v1578
        %v1605 = vadd.f32 %v1195, %v1583
        %v1606 = vadd.f32 %v1200, %v1588
        %v1607 = vld [vmem:[%s3] sm:$0x1]
        %v1609 = vlaneseq
        %v1610 = vshrl.u32 %v1609, 7
        %v1611 = vsub.s32 0, %v1610
        %v1612 = vrot.slane %v1607, %v1611
        %v1614 = vadd.f32 %v1591, %v1612
        %v1615 = vadd.f32 %v1592, %v1612
        %v1616 = vadd.f32 %v1593, %v1612
        %v1617 = vadd.f32 %v1594, %v1612
        %v1618 = vadd.f32 %v1595, %v1612
        %v1619 = vadd.f32 %v1596, %v1612
        %v1620 = vadd.f32 %v1597, %v1612
        %v1621 = vadd.f32 %v1598, %v1612
        %v1622 = vadd.f32 %v1599, %v1612
        %v1623 = vadd.f32 %v1600, %v1612
        %v1624 = vadd.f32 %v1601, %v1612
        %v1625 = vadd.f32 %v1602, %v1612
        %v1626 = vadd.f32 %v1603, %v1612
        %v1627 = vadd.f32 %v1604, %v1612
        %v1628 = vadd.f32 %v1605, %v1612
        %v1629 = vadd.f32 %v1606, %v1612
        %v1630 = vmax.f32 %v1614, 0.0
        %v1631 = vmax.f32 %v1615, 0.0
        %v1632 = vmax.f32 %v1616, 0.0
        %v1633 = vmax.f32 %v1617, 0.0
        %v1634 = vmax.f32 %v1618, 0.0
        %v1635 = vmax.f32 %v1619, 0.0
        %v1636 = vmax.f32 %v1620, 0.0
        %v1637 = vmax.f32 %v1621, 0.0
        %v1638 = vmax.f32 %v1622, 0.0
        %v1639 = vmax.f32 %v1623, 0.0
        %v1640 = vmax.f32 %v1624, 0.0
        %v1641 = vmax.f32 %v1625, 0.0
        %v1642 = vmax.f32 %v1626, 0.0
        %v1643 = vmax.f32 %v1627, 0.0
        %v1644 = vmax.f32 %v1628, 0.0
        %v1645 = vmax.f32 %v1629, 0.0
        %1646 = vst [vmem:[%s270] sm:$0xff] %v1630
        %1647 = vst [vmem:[%s270 + $0x8] sm:$0xff] %v1631
        %1648 = vst [vmem:[%s270 + $0x10] sm:$0xff] %v1632
        %1649 = vst [vmem:[%s270 + $0x18] sm:$0xff] %v1633
        %1650 = vst [vmem:[%s270 + $0x20] sm:$0xff] %v1634
        %1651 = vst [vmem:[%s270 + $0x28] sm:$0xff] %v1635
        %1652 = vst [vmem:[%s270 + $0x30] sm:$0xff] %v1636
        %1653 = vst [vmem:[%s270 + $0x38] sm:$0xff] %v1637
        %1654 = vst [vmem:[%s270 + $0x40] sm:$0xff] %v1638
        %1655 = vst [vmem:[%s270 + $0x48] sm:$0xff] %v1639
        %1656 = vst [vmem:[%s270 + $0x50] sm:$0xff] %v1640
        %1657 = vst [vmem:[%s270 + $0x58] sm:$0xff] %v1641
        %1658 = vst [vmem:[%s270 + $0x60] sm:$0xff] %v1642
        %1659 = vst [vmem:[%s270 + $0x68] sm:$0xff] %v1643
        %1660 = vst [vmem:[%s270 + $0x70] sm:$0xff] %v1644
        %1661 = vst [vmem:[%s270 + $0x78] sm:$0xff] %v1645
        %s1662 = sand.u32 %s142, 1
        %s1663 = scalar_lea.sflag [#allocation4], %s1662
        %s1664 = sand.u32 %s142, 1
        %s1665 = smul.addr %s1664, 128
        %s1666 = scalar_lea.vmem [#allocation3], %s1665
        // Predicated region
        $region37: #{tpu_custom_call.1} parent=35 // pred_check
          %p1667 = pneg %p152
        $region38: #{tpu_custom_call.1} parent=35 // pred_check_branch
          %1669 = sbr.rel (%p1667) target = $region40
        $region39: #{tpu_custom_call.1} parent=35 // pred_region
          %s1670 = smul.u32 8, %s23
          %s1672 = ssub.s32 2048, 2048
          %1673 = vsyncadd %s1663, %s1672
          %s1674 = smul.addr %s1670, 2
          %s1675 = smul.addr %s22, 32
          %s1676 = sadd.s32 %s1674, %s1675
          %s1677 = smul.addr %s1676, 128
          %s1678 = scalar_lea.hbm %s4, %s1677
          %s1679 = sshll.u32 %s1666, 4
          %s1680 = int_to_ptr.vmem [resolvable:$true] %s1679
          %1685 = dma.vmem_to_hbm [thread:$0]  %s1680, 2048, %s1678, %s1663, 128, 128, 8
        $region40: #{tpu_custom_call.1} parent=35 // pred_fallthru
          _
      $region36: #{tpu_custom_call.1} parent=5 // pred_fallthru
        _
      %p1686 = scmp.le.s32.totalorder 2, %s13
      // Predicated region
      $region41: #{tpu_custom_call.1} parent=5 // pred_check
        %p1687 = pneg %p1686
      $region42: #{tpu_custom_call.1} parent=5 // pred_check_branch
        %1689 = sbr.rel (%p1687) target = $region44
      $region43: #{tpu_custom_call.1} parent=5 // pred_region
        %s1690 = ssub.s32 %s13, 2
        // Predicated region
        $region45: #{tpu_custom_call.1} parent=43 // pred_check
          %p1691 = pneg %p158
        $region46: #{tpu_custom_call.1} parent=43 // pred_check_branch
          %1693 = sbr.rel (%p1691) target = $region48
        $region47: #{tpu_custom_call.1} parent=43 // pred_region
          %s1694 = sand.u32 %s143, 1
          %s1695 = scalar_lea.sflag [#allocation4], %s1694
          %s1696 = sand.u32 %s143, 1
          %s1697 = smul.addr %s1696, 128
          %s1698 = scalar_lea.vmem [#allocation3], %s1697
          %1699 = dma.done %s1695, 2048
        $region48: #{tpu_custom_call.1} parent=43 // pred_fallthru
          _
      $region44: #{tpu_custom_call.1} parent=5 // pred_fallthru
        _
    $region6: #{tpu_custom_call.1} parent=1 // loop_footer
      %s17 = sadd.s32 1, %s13
    $region7: #{tpu_custom_call.1} parent=1 // loop_footer_branch
      %12 = sbr.rel target = $region3
    $region8: #{tpu_custom_call.1} parent=1 // loop_exit
      _
    %1700 = vsyncpa [#allocation4], 1
    %s1701 = scalar_lea.sflag [#allocation4], 1
    %1702 = vsyncpa %s1701, 1

</llo_original>
